<compile_context>
chip_gen: v7x
topology: tpu7x:2x2x1
jax: 0.10.0
libtpu: 0.0.40
codegen_flags: <defaults>
</compile_context>

<pallas_src>
import functools
import math

import jax
import jax.numpy as jnp
from jax import lax
from jax.experimental import pallas as pl
from jax.experimental.pallas import tpu as pltpu

_BN_EPS = 1e-5
_LANE = 128


def _round_up(n, m):
    return (n + m - 1) // m * m


# ----------------------------- in-kernel math helpers -----------------------------
def _erf(x):
    # Abramowitz & Stegun 7.1.26 (|err| < 1.5e-7); divide replaced with EUP approx reciprocal.
    a1, a2, a3, a4, a5 = 0.254829592, -0.284496736, 1.421413741, -1.453152027, 1.061405429
    p = 0.3275911
    sgn = jnp.where(x >= 0.0, 1.0, -1.0)
    ax = jnp.abs(x)
    t = pl.reciprocal(1.0 + p * ax, approx=True)
    poly = ((((a5 * t + a4) * t + a3) * t + a2) * t + a1) * t
    return sgn * (1.0 - poly * jnp.exp(-ax * ax))


def _gelu(x):
    # exact (erf-based) GELU, matching torch.nn.GELU() default
    return 0.5 * x * (1.0 + _erf(x * (1.0 / math.sqrt(2.0))))


def _batchnorm(x, axes, count, gamma, beta):
    # One-pass batch statistics: E[x], E[x^2]. Zero-padded lanes contribute
    # zero to both sums, so dividing by the *real* element count `count`
    # yields exact statistics for the un-padded tensor.
    inv = 1.0 / float(count)
    s = jnp.sum(x, axis=axes, keepdims=True)
    ss = jnp.sum(x * x, axis=axes, keepdims=True)
    mean = s * inv
    var = jnp.maximum(ss * inv - mean * mean, 0.0)      # biased var (training-mode BN)
    scale = gamma * lax.rsqrt(var + _BN_EPS)            # fold gamma into rsqrt
    shift = beta - mean * scale                         # fold beta/mean into one shift
    return x * scale + shift


# ----------------------------------- kernel -----------------------------------
def _leff_kernel(
    xp_ref,                       # (B, P, Cp)  patch tokens (lane-padded)
    w1_ref, b1_ref,               # expansion Linear: (Cp, ECp) bf16, (1, ECp) f32
    g1_ref, be1_ref,              # BatchNorm1d(P):   (P, 1), (P, 1)
    dwk_ref, dwb_ref,             # depthwise conv:   (KH*KW, ECp), (1, ECp)
    pww_ref, pwb_ref,             # pointwise 1x1:    (ECp, ECp) bf16, (1, ECp)
    g2_ref, be2_ref,              # BatchNorm2d(EC):  (1, ECp), (1, ECp)
    w2_ref, b2_ref,               # reduction Linear: (ECp, Cp) bf16, (1, Cp)
    g3_ref, be3_ref,              # BatchNorm1d(P):   (P, 1), (P, 1)
    out_ref,                      # (B, P, Cp)
    pad_ref,                      # VMEM scratch: (B, H+2p, W+2p, ECp)
    *, H, W, KH, KW, padding, separable, c_real, ec_real,
):
    B, P, Cp = xp_ref.shape
    ECp = w1_ref.shape[1]

    # ---- expansion: Linear (bf16 MXU, f32 acc) -> BatchNorm1d(tokens) -> GELU ----
    x2 = xp_ref[...].reshape(B * P, Cp).astype(jnp.bfloat16)
    y = jnp.dot(x2, w1_ref[...], preferred_element_type=jnp.float32) + b1_ref[...]
    y = y.reshape(B, P, ECp)
    y = _gelu(_batchnorm(y, (0, 2), B * ec_real, g1_ref[...], be1_ref[...]))

    # ---- depthwise conv in NHWC via halo-padded VMEM buffer ----
    # Zero only the halo ring; write the interior once (no double staging).
    Bp, Hp, Wp, _ = pad_ref.shape
    if padding > 0:
        pad_ref[:, :padding, :, :] = jnp.zeros((B, padding, Wp, ECp), jnp.float32)
        pad_ref[:, padding + H:, :, :] = jnp.zeros((B, Hp - padding - H, Wp, ECp), jnp.float32)
        pad_ref[:, padding:padding + H, :padding, :] = jnp.zeros((B, H, padding, ECp), jnp.float32)
        pad_ref[:, padding:padding + H, padding + W:, :] = jnp.zeros(
            (B, H, Wp - padding - W, ECp), jnp.float32)
    pad_ref[:, padding:padding + H, padding:padding + W, :] = y.reshape(B, H, W, ECp)

    # Whole-image accumulation: one big FMA per tap (KH*KW total), bias fused.
    k = dwk_ref[...]                              # (KH*KW, ECp)
    acc = None
    for dh in range(KH):
        for dw in range(KW):
            tap = pad_ref[:, dh:dh + H, dw:dw + W, :] * k[dh * KW + dw]
            acc = tap if acc is None else acc + tap
    conv = acc + dwb_ref[...]                     # (B, H, W, ECp)

    z = conv.reshape(B * P, ECp)
    # optional separable pointwise 1x1 conv (pure channel mixing -> bf16 matmul)
    if separable:
        z = jnp.dot(z.astype(jnp.bfloat16), pww_ref[...],
                    preferred_element_type=jnp.float32) + pwb_ref[...]
    z = z.reshape(B, P, ECp)

    # BatchNorm2d over (batch, spatial) per channel == axes (0, 1) in (B, P, ECp)
    z = _gelu(_batchnorm(z, (0, 1), B * P, g2_ref[...], be2_ref[...]))

    # ---- reduction: Linear (bf16 MXU) -> BatchNorm1d(tokens) -> GELU ----
    r = jnp.dot(z.reshape(B * P, ECp).astype(jnp.bfloat16), w2_ref[...],
                preferred_element_type=jnp.float32) + b2_ref[...]
    r = r.reshape(B, P, Cp)
    out_ref[...] = _gelu(_batchnorm(r, (0, 2), B * c_real, g3_ref[...], be3_ref[...]))


# --------------------------------- wrapper / glue ---------------------------------
def leff_forward(x, params, *, num_tokens, in_features, expand_ratio,
                 depthwise_kernel, depthwise_stride, depthwise_padding,
                 depthwise_separable):
    assert depthwise_stride == 1, "LeFF requires spatial size to be preserved"
    B, N, C = x.shape
    assert N == num_tokens and C == in_features
    side = int(math.sqrt(num_tokens))
    P = side * side
    assert P == num_tokens - 1, "num_tokens must be grid**2 + 1"
    H = W = side
    EC = expand_ratio * in_features
    KH = KW = depthwise_kernel
    assert H + 2 * depthwise_padding - KH + 1 == H, "conv must preserve spatial dims"

    # Lane-pad channel dims to multiples of 128 so every vreg / MXU pass and the
    # output store are lane-dense. Padded lanes are exact zeros end-to-end (zero
    # weight rows/cols, zero biases, zero BN gamma/beta) and are sliced away below.
    Cp = _round_up(C, _LANE)
    ECp = _round_up(EC, _LANE)

    def padl(a, n):   # zero-pad last axis to n
        return jnp.pad(a, [(0, 0)] * (a.ndim - 1) + [(0, n - a.shape[-1])])

    def pad2(a, r, c):
        return jnp.pad(a, ((0, r - a.shape[0]), (0, c - a.shape[1])))

    class_token = x[:, :1, :]
    patch = padl(x[:, 1:, :], Cp)

    w1 = pad2(params["w1"], Cp, ECp).astype(jnp.bfloat16)
    pww = pad2(params["pww"], ECp, ECp).astype(jnp.bfloat16)
    w2 = pad2(params["w2"], ECp, Cp).astype(jnp.bfloat16)
    b1 = padl(params["b1"], ECp)
    dwk = padl(params["dwk"], ECp)
    dwb = padl(params["dwb"], ECp)
    pwb = padl(params["pwb"], ECp)
    g2 = padl(params["g2"], ECp)
    be2 = padl(params["be2"], ECp)
    b2 = padl(params["b2"], Cp)

    kernel = functools.partial(
        _leff_kernel, H=H, W=W, KH=KH, KW=KW,
        padding=depthwise_padding, separable=depthwise_separable,
        c_real=C, ec_real=EC)

    Hp = H + 2 * depthwise_padding
    Wp = W + 2 * depthwise_padding

    vmem = pl.BlockSpec(memory_space=pltpu.MemorySpace.VMEM)
    out_patch = pl.pallas_call(
        kernel,
        out_shape=jax.ShapeDtypeStruct((B, P, Cp), jnp.float32),
        in_specs=[vmem] * 15,
        out_specs=vmem,
        scratch_shapes=[pltpu.VMEM((B, Hp, Wp, ECp), jnp.float32)],
        compiler_params=pltpu.CompilerParams(vmem_limit_bytes=32 * 1024 * 1024),
    )(
        patch,
        w1, b1, params["g1"], params["be1"],
        dwk, dwb, pww, pwb,
        g2, be2,
        w2, b2, params["g3"], params["be3"],
    )
    return jnp.concatenate([class_token, out_patch[:, :, :C]], axis=1)


def init_params(key, *, num_tokens, in_features, expand_ratio, depthwise_kernel):
    side = int(math.sqrt(num_tokens))
    P = side * side
    C = in_features
    EC = expand_ratio * C
    K = depthwise_kernel
    ks = jax.random.split(key, 14)

    def n(k, shape, scale):
        return scale * jax.random.normal(k, shape, jnp.float32)

    return dict(
        w1=n(ks[0], (C, EC), 0.2),       b1=n(ks[1], (1, EC), 0.1),
        g1=1.0 + n(ks[2], (P, 1), 0.1),  be1=n(ks[3], (P, 1), 0.05),
        dwk=n(ks[4], (K * K, EC), 0.2),  dwb=n(ks[5], (1, EC), 0.1),
        pww=n(ks[6], (EC, EC), 0.1),     pwb=n(ks[7], (1, EC), 0.1),
        g2=1.0 + n(ks[8], (1, EC), 0.1), be2=n(ks[9], (1, EC), 0.05),
        w2=n(ks[10], (EC, C), 0.2),      b2=n(ks[11], (1, C), 0.1),
        g3=1.0 + n(ks[12], (P, 1), 0.1), be3=n(ks[13], (P, 1), 0.05),
    )


# ---------------------------- pure-JAX reference (for checking) ----------------------------
def leff_reference(x, params, *, num_tokens, in_features, expand_ratio,
                   depthwise_kernel, depthwise_padding, depthwise_separable):
    side = int(math.sqrt(num_tokens))
    P = side * side
    C = in_features
    EC = expand_ratio * C
    K = depthwise_kernel
    B = x.shape[0]

    def bn(v, axes, g, b):
        m = jnp.mean(v, axis=axes, keepdims=True)
        var = jnp.mean((v - m) ** 2, axis=axes, keepdims=True)
        return (v - m) / jnp.sqrt(var + _BN_EPS) * g + b

    def gelu(v):
        return jax.nn.gelu(v, approximate=False)

    cls, patch = x[:, :1, :], x[:, 1:, :]
    y = patch @ params["w1"] + params["b1"]
    y = gelu(bn(y, (0, 2), params["g1"], params["be1"]))

    img = jnp.transpose(y, (0, 2, 1)).reshape(B, EC, side, side)          # NCHW like torch
    w_dw = jnp.transpose(params["dwk"].reshape(K, K, EC), (2, 0, 1))[:, None, :, :]
    conv = lax.conv_general_dilated(
        img, w_dw, window_strides=(1, 1),
        padding=((depthwise_padding, depthwise_padding),) * 2,
        feature_group_count=EC,
        dimension_numbers=("NCHW", "OIHW", "NCHW"))
    conv = conv + params["dwb"].reshape(1, EC, 1, 1)
    if depthwise_separable:
        w_pw = jnp.transpose(params["pww"])[:, :, None, None]
        conv = lax.conv_general_dilated(
            conv, w_pw, (1, 1), "VALID",
            dimension_numbers=("NCHW", "OIHW", "NCHW"))
        conv = conv + params["pwb"].reshape(1, EC, 1, 1)
    conv = gelu(bn(conv, (0, 2, 3),
                   params["g2"].reshape(1, EC, 1, 1),
                   params["be2"].reshape(1, EC, 1, 1)))

    z = jnp.transpose(conv.reshape(B, EC, P), (0, 2, 1))
    r = z @ params["w2"] + params["b2"]
    r = gelu(bn(r, (0, 2), params["g3"], params["be3"]))
    return jnp.concatenate([cls, r], axis=1)


# ------------------------------------- main -------------------------------------
if __name__ == "__main__":
    B = 2
    num_tokens = 17          # 4x4 = 16 patch tokens + 1 class token
    in_features = 8
    expand_ratio = 4
    depthwise_kernel = 3
    depthwise_stride = 1
    depthwise_padding = 1
    depthwise_separable = True

    key = jax.random.PRNGKey(0)
    kx, kp = jax.random.split(key)
    x = jax.random.normal(kx, (B, num_tokens, in_features), jnp.float32)
    params = init_params(kp, num_tokens=num_tokens, in_features=in_features,
                         expand_ratio=expand_ratio, depthwise_kernel=depthwise_kernel)

    out = leff_forward(
        x, params,
        num_tokens=num_tokens, in_features=in_features, expand_ratio=expand_ratio,
        depthwise_kernel=depthwise_kernel, depthwise_stride=depthwise_stride,
        depthwise_padding=depthwise_padding, depthwise_separable=depthwise_separable)
    out = jax.block_until_ready(out)

    assert out.shape == (B, num_tokens, in_features)

    ref = leff_reference(
        x, params,
        num_tokens=num_tokens, in_features=in_features, expand_ratio=expand_ratio,
        depthwise_kernel=depthwise_kernel, depthwise_padding=depthwise_padding,
        depthwise_separable=depthwise_separable)
    max_err = float(jnp.max(jnp.abs(out - ref)))
    if not max_err < 5e-2:   # generous: covers bf16 MXU operands + approx reciprocal
        raise AssertionError(f"kernel/reference mismatch: max|diff|={max_err}")

    print("KERNEL_OK")
</pallas_src>

<mosaic_0001>
module attributes {stable_mosaic.version = 11 : i64} {
  func.func @_leff_kernel(%arg0: memref<2x16x128xf32, #tpu.memory_space<vmem>>, %arg1: memref<128x128xbf16, #tpu.memory_space<vmem>>, %arg2: memref<1x128xf32, #tpu.memory_space<vmem>>, %arg3: memref<16x1xf32, #tpu.memory_space<vmem>>, %arg4: memref<16x1xf32, #tpu.memory_space<vmem>>, %arg5: memref<9x128xf32, #tpu.memory_space<vmem>>, %arg6: memref<1x128xf32, #tpu.memory_space<vmem>>, %arg7: memref<128x128xbf16, #tpu.memory_space<vmem>>, %arg8: memref<1x128xf32, #tpu.memory_space<vmem>>, %arg9: memref<1x128xf32, #tpu.memory_space<vmem>>, %arg10: memref<1x128xf32, #tpu.memory_space<vmem>>, %arg11: memref<128x128xbf16, #tpu.memory_space<vmem>>, %arg12: memref<1x128xf32, #tpu.memory_space<vmem>>, %arg13: memref<16x1xf32, #tpu.memory_space<vmem>>, %arg14: memref<16x1xf32, #tpu.memory_space<vmem>>, %arg15: memref<2x16x128xf32, #tpu.memory_space<vmem>>, %arg16: memref<2x6x6x128xf32, #tpu.memory_space<vmem>>) attributes {dimension_semantics = [], scalar_prefetch = 0 : i64, scratch_operands = 1 : i64, tpu.core_type = #tpu.core_type<tc>} {
    %c0 = arith.constant 0 : index
    %c0_0 = arith.constant 0 : index
    %c0_1 = arith.constant 0 : index
    %0 = vector.load %arg0[%c0, %c0_0, %c0_1] : memref<2x16x128xf32, #tpu.memory_space<vmem>>, vector<2x16x128xf32>
    %1 = vector.shape_cast %0 : vector<2x16x128xf32> to vector<32x128xf32>
    %2 = arith.truncf %1 : vector<32x128xf32> to vector<32x128xbf16>
    %c0_2 = arith.constant 0 : index
    %c0_3 = arith.constant 0 : index
    %3 = vector.load %arg1[%c0_2, %c0_3] : memref<128x128xbf16, #tpu.memory_space<vmem>>, vector<128x128xbf16>
    %cst = arith.constant dense<0.000000e+00> : vector<32x128xf32>
    %4 = tpu.matmul %2, %3, %cst {dimension_numbers = #tpu.dot_dimension_numbers<[1], [0], [0], [1], [0, 0, 1, 1], [], []>} : vector<32x128xbf16>, vector<128x128xbf16>, vector<32x128xf32> -> vector<32x128xf32>
    %c0_4 = arith.constant 0 : index
    %c0_5 = arith.constant 0 : index
    %5 = vector.load %arg2[%c0_4, %c0_5] : memref<1x128xf32, #tpu.memory_space<vmem>>, vector<1x128xf32>
    %6 = vector.broadcast %5 : vector<1x128xf32> to vector<32x128xf32>
    %7 = arith.addf %4, %6 : vector<32x128xf32>
    %8 = vector.shape_cast %7 : vector<32x128xf32> to vector<2x16x128xf32>
    %c0_6 = arith.constant 0 : index
    %c0_7 = arith.constant 0 : index
    %9 = vector.load %arg3[%c0_6, %c0_7] : memref<16x1xf32, #tpu.memory_space<vmem>>, vector<16x1xf32>
    %c0_8 = arith.constant 0 : index
    %c0_9 = arith.constant 0 : index
    %10 = vector.load %arg4[%c0_8, %c0_9] : memref<16x1xf32, #tpu.memory_space<vmem>>, vector<16x1xf32>
    %cst_10 = arith.constant dense<0.000000e+00> : vector<16xf32>
    %11 = vector.multi_reduction <add>, %8, %cst_10 [0, 2] : vector<2x16x128xf32> to vector<16xf32>
    %12 = vector.shape_cast %11 : vector<16xf32> to vector<1x16x1xf32>
    %13 = arith.mulf %8, %8 : vector<2x16x128xf32>
    %cst_11 = arith.constant dense<0.000000e+00> : vector<16xf32>
    %14 = vector.multi_reduction <add>, %13, %cst_11 [0, 2] : vector<2x16x128xf32> to vector<16xf32>
    %15 = vector.shape_cast %14 : vector<16xf32> to vector<1x16x1xf32>
    %cst_12 = arith.constant 1.562500e-02 : f32
    %16 = vector.broadcast %cst_12 : f32 to vector<1x16x1xf32>
    %17 = arith.mulf %12, %16 : vector<1x16x1xf32>
    %cst_13 = arith.constant 1.562500e-02 : f32
    %18 = vector.broadcast %cst_13 : f32 to vector<1x16x1xf32>
    %19 = arith.mulf %15, %18 : vector<1x16x1xf32>
    %20 = arith.mulf %17, %17 : vector<1x16x1xf32>
    %21 = arith.subf %19, %20 : vector<1x16x1xf32>
    %cst_14 = arith.constant 0.000000e+00 : f32
    %22 = vector.broadcast %cst_14 : f32 to vector<1x16x1xf32>
    %23 = arith.maximumf %21, %22 : vector<1x16x1xf32>
    %cst_15 = arith.constant 9.99999974E-6 : f32
    %24 = vector.broadcast %cst_15 : f32 to vector<1x16x1xf32>
    %25 = arith.addf %23, %24 : vector<1x16x1xf32>
    %26 = math.rsqrt %25 : vector<1x16x1xf32>
    %27 = vector.shape_cast %9 : vector<16x1xf32> to vector<1x16x1xf32>
    %28 = arith.mulf %27, %26 : vector<1x16x1xf32>
    %29 = arith.mulf %17, %28 : vector<1x16x1xf32>
    %30 = vector.shape_cast %10 : vector<16x1xf32> to vector<1x16x1xf32>
    %31 = arith.subf %30, %29 : vector<1x16x1xf32>
    %32 = vector.broadcast %28 : vector<1x16x1xf32> to vector<2x16x128xf32>
    %33 = arith.mulf %8, %32 : vector<2x16x128xf32>
    %34 = vector.broadcast %31 : vector<1x16x1xf32> to vector<2x16x128xf32>
    %35 = arith.addf %33, %34 : vector<2x16x128xf32>
    %cst_16 = arith.constant 5.000000e-01 : f32
    %36 = vector.broadcast %cst_16 : f32 to vector<2x16x128xf32>
    %37 = arith.mulf %36, %35 : vector<2x16x128xf32>
    %cst_17 = arith.constant 0.707106769 : f32
    %38 = vector.broadcast %cst_17 : f32 to vector<2x16x128xf32>
    %39 = arith.mulf %35, %38 : vector<2x16x128xf32>
    %cst_18 = arith.constant 0.000000e+00 : f32
    %40 = vector.broadcast %cst_18 : f32 to vector<2x16x128xf32>
    %41 = arith.cmpf oge, %39, %40 : vector<2x16x128xf32>
    %cst_19 = arith.constant 1.000000e+00 : f32
    %cst_20 = arith.constant -1.000000e+00 : f32
    %42 = vector.broadcast %cst_19 : f32 to vector<2x16x128xf32>
    %43 = vector.broadcast %cst_20 : f32 to vector<2x16x128xf32>
    %44 = arith.select %41, %42, %43 : vector<2x16x128xi1>, vector<2x16x128xf32>
    %45 = math.absf %39 : vector<2x16x128xf32>
    %cst_21 = arith.constant 0.327591091 : f32
    %46 = vector.broadcast %cst_21 : f32 to vector<2x16x128xf32>
    %47 = arith.mulf %46, %45 : vector<2x16x128xf32>
    %cst_22 = arith.constant 1.000000e+00 : f32
    %48 = vector.broadcast %cst_22 : f32 to vector<2x16x128xf32>
    %49 = arith.addf %48, %47 : vector<2x16x128xf32>
    %50 = tpu.reciprocal %49 {approx = true} : vector<2x16x128xf32> -> vector<2x16x128xf32>
    %cst_23 = arith.constant 1.06140542 : f32
    %51 = vector.broadcast %cst_23 : f32 to vector<2x16x128xf32>
    %52 = arith.mulf %51, %50 : vector<2x16x128xf32>
    %cst_24 = arith.constant -1.45315206 : f32
    %53 = vector.broadcast %cst_24 : f32 to vector<2x16x128xf32>
    %54 = arith.addf %52, %53 : vector<2x16x128xf32>
    %55 = arith.mulf %54, %50 : vector<2x16x128xf32>
    %cst_25 = arith.constant 1.42141378 : f32
    %56 = vector.broadcast %cst_25 : f32 to vector<2x16x128xf32>
    %57 = arith.addf %55, %56 : vector<2x16x128xf32>
    %58 = arith.mulf %57, %50 : vector<2x16x128xf32>
    %cst_26 = arith.constant -0.284496725 : f32
    %59 = vector.broadcast %cst_26 : f32 to vector<2x16x128xf32>
    %60 = arith.addf %58, %59 : vector<2x16x128xf32>
    %61 = arith.mulf %60, %50 : vector<2x16x128xf32>
    %cst_27 = arith.constant 0.254829586 : f32
    %62 = vector.broadcast %cst_27 : f32 to vector<2x16x128xf32>
    %63 = arith.addf %61, %62 : vector<2x16x128xf32>
    %64 = arith.mulf %63, %50 : vector<2x16x128xf32>
    %cst_28 = arith.constant 0.000000e+00 : f32
    %65 = vector.broadcast %cst_28 : f32 to vector<2x16x128xf32>
    %66 = arith.subf %65, %45 : vector<2x16x128xf32>
    %67 = arith.mulf %66, %45 : vector<2x16x128xf32>
    %68 = math.exp %67 : vector<2x16x128xf32>
    %69 = arith.mulf %64, %68 : vector<2x16x128xf32>
    %cst_29 = arith.constant 1.000000e+00 : f32
    %70 = vector.broadcast %cst_29 : f32 to vector<2x16x128xf32>
    %71 = arith.subf %70, %69 : vector<2x16x128xf32>
    %72 = arith.mulf %44, %71 : vector<2x16x128xf32>
    %cst_30 = arith.constant 1.000000e+00 : f32
    %73 = vector.broadcast %cst_30 : f32 to vector<2x16x128xf32>
    %74 = arith.addf %73, %72 : vector<2x16x128xf32>
    %75 = arith.mulf %37, %74 : vector<2x16x128xf32>
    %cst_31 = arith.constant 0.000000e+00 : f32
    %76 = vector.broadcast %cst_31 : f32 to vector<2x1x6x128xf32>
    %c0_32 = arith.constant 0 : index
    %c0_33 = arith.constant 0 : index
    %c0_34 = arith.constant 0 : index
    %c0_35 = arith.constant 0 : index
    %77 = vector.load %arg16[%c0_32, %c0_33, %c0_34, %c0_35] : memref<2x6x6x128xf32, #tpu.memory_space<vmem>>, vector<2x1x6x128xf32>
    tpu.vector_store %arg16[%c0_32, %c0_33, %c0_34, %c0_35], %76 {strides = array<i32>} : memref<2x6x6x128xf32, #tpu.memory_space<vmem>>, vector<2x1x6x128xf32>,
    %cst_36 = arith.constant 0.000000e+00 : f32
    %78 = vector.broadcast %cst_36 : f32 to vector<2x1x6x128xf32>
    %c0_37 = arith.constant 0 : index
    %c5 = arith.constant 5 : index
    %c0_38 = arith.constant 0 : index
    %c0_39 = arith.constant 0 : index
    %79 = vector.load %arg16[%c0_37, %c5, %c0_38, %c0_39] : memref<2x6x6x128xf32, #tpu.memory_space<vmem>>, vector<2x1x6x128xf32>
    tpu.vector_store %arg16[%c0_37, %c5, %c0_38, %c0_39], %78 {strides = array<i32>} : memref<2x6x6x128xf32, #tpu.memory_space<vmem>>, vector<2x1x6x128xf32>,
    %cst_40 = arith.constant 0.000000e+00 : f32
    %80 = vector.broadcast %cst_40 : f32 to vector<2x4x1x128xf32>
    %c0_41 = arith.constant 0 : index
    %c1 = arith.constant 1 : index
    %c0_42 = arith.constant 0 : index
    %c0_43 = arith.constant 0 : index
    %81 = vector.load %arg16[%c0_41, %c1, %c0_42, %c0_43] : memref<2x6x6x128xf32, #tpu.memory_space<vmem>>, vector<2x4x1x128xf32>
    tpu.vector_store %arg16[%c0_41, %c1, %c0_42, %c0_43], %80 {strides = array<i32>} : memref<2x6x6x128xf32, #tpu.memory_space<vmem>>, vector<2x4x1x128xf32>,
    %cst_44 = arith.constant 0.000000e+00 : f32
    %82 = vector.broadcast %cst_44 : f32 to vector<2x4x1x128xf32>
    %c0_45 = arith.constant 0 : index
    %c1_46 = arith.constant 1 : index
    %c5_47 = arith.constant 5 : index
    %c0_48 = arith.constant 0 : index
    %83 = vector.load %arg16[%c0_45, %c1_46, %c5_47, %c0_48] : memref<2x6x6x128xf32, #tpu.memory_space<vmem>>, vector<2x4x1x128xf32>
    tpu.vector_store %arg16[%c0_45, %c1_46, %c5_47, %c0_48], %82 {strides = array<i32>} : memref<2x6x6x128xf32, #tpu.memory_space<vmem>>, vector<2x4x1x128xf32>,
    %84 = vector.shape_cast %75 : vector<2x16x128xf32> to vector<2x4x4x128xf32>
    %c0_49 = arith.constant 0 : index
    %c1_50 = arith.constant 1 : index
    %c1_51 = arith.constant 1 : index
    %c0_52 = arith.constant 0 : index
    %85 = vector.load %arg16[%c0_49, %c1_50, %c1_51, %c0_52] : memref<2x6x6x128xf32, #tpu.memory_space<vmem>>, vector<2x4x4x128xf32>
    tpu.vector_store %arg16[%c0_49, %c1_50, %c1_51, %c0_52], %84 {strides = array<i32>} : memref<2x6x6x128xf32, #tpu.memory_space<vmem>>, vector<2x4x4x128xf32>,
    %c0_53 = arith.constant 0 : index
    %c0_54 = arith.constant 0 : index
    %86 = vector.load %arg5[%c0_53, %c0_54] : memref<9x128xf32, #tpu.memory_space<vmem>>, vector<9x128xf32>
    %c0_55 = arith.constant 0 : index
    %c0_56 = arith.constant 0 : index
    %c0_57 = arith.constant 0 : index
    %c0_58 = arith.constant 0 : index
    %87 = vector.load %arg16[%c0_55, %c0_56, %c0_57, %c0_58] : memref<2x6x6x128xf32, #tpu.memory_space<vmem>>, vector<2x4x4x128xf32>
    %88 = vector.extract_strided_slice %86 {offsets = [0, 0], sizes = [1, 128], strides = [1, 1]} : vector<9x128xf32> to vector<1x128xf32>
    %89 = vector.shape_cast %88 : vector<1x128xf32> to vector<128xf32>
    %90 = vector.shape_cast %89 : vector<128xf32> to vector<1x1x1x128xf32>
    %91 = vector.broadcast %90 : vector<1x1x1x128xf32> to vector<2x4x4x128xf32>
    %92 = arith.mulf %87, %91 : vector<2x4x4x128xf32>
    %c0_59 = arith.constant 0 : index
    %c0_60 = arith.constant 0 : index
    %c1_61 = arith.constant 1 : index
    %c0_62 = arith.constant 0 : index
    %93 = vector.load %arg16[%c0_59, %c0_60, %c1_61, %c0_62] : memref<2x6x6x128xf32, #tpu.memory_space<vmem>>, vector<2x4x4x128xf32>
    %94 = vector.extract_strided_slice %86 {offsets = [1, 0], sizes = [1, 128], strides = [1, 1]} : vector<9x128xf32> to vector<1x128xf32>
    %95 = vector.shape_cast %94 : vector<1x128xf32> to vector<128xf32>
    %96 = vector.shape_cast %95 : vector<128xf32> to vector<1x1x1x128xf32>
    %97 = vector.broadcast %96 : vector<1x1x1x128xf32> to vector<2x4x4x128xf32>
    %98 = arith.mulf %93, %97 : vector<2x4x4x128xf32>
    %99 = arith.addf %92, %98 : vector<2x4x4x128xf32>
    %c0_63 = arith.constant 0 : index
    %c0_64 = arith.constant 0 : index
    %c2 = arith.constant 2 : index
    %c0_65 = arith.constant 0 : index
    %100 = vector.load %arg16[%c0_63, %c0_64, %c2, %c0_65] : memref<2x6x6x128xf32, #tpu.memory_space<vmem>>, vector<2x4x4x128xf32>
    %101 = vector.extract_strided_slice %86 {offsets = [2, 0], sizes = [1, 128], strides = [1, 1]} : vector<9x128xf32> to vector<1x128xf32>
    %102 = vector.shape_cast %101 : vector<1x128xf32> to vector<128xf32>
    %103 = vector.shape_cast %102 : vector<128xf32> to vector<1x1x1x128xf32>
    %104 = vector.broadcast %103 : vector<1x1x1x128xf32> to vector<2x4x4x128xf32>
    %105 = arith.mulf %100, %104 : vector<2x4x4x128xf32>
    %106 = arith.addf %99, %105 : vector<2x4x4x128xf32>
    %c0_66 = arith.constant 0 : index
    %c1_67 = arith.constant 1 : index
    %c0_68 = arith.constant 0 : index
    %c0_69 = arith.constant 0 : index
    %107 = vector.load %arg16[%c0_66, %c1_67, %c0_68, %c0_69] : memref<2x6x6x128xf32, #tpu.memory_space<vmem>>, vector<2x4x4x128xf32>
    %108 = vector.extract_strided_slice %86 {offsets = [3, 0], sizes = [1, 128], strides = [1, 1]} : vector<9x128xf32> to vector<1x128xf32>
    %109 = vector.shape_cast %108 : vector<1x128xf32> to vector<128xf32>
    %110 = vector.shape_cast %109 : vector<128xf32> to vector<1x1x1x128xf32>
    %111 = vector.broadcast %110 : vector<1x1x1x128xf32> to vector<2x4x4x128xf32>
    %112 = arith.mulf %107, %111 : vector<2x4x4x128xf32>
    %113 = arith.addf %106, %112 : vector<2x4x4x128xf32>
    %c0_70 = arith.constant 0 : index
    %c1_71 = arith.constant 1 : index
    %c1_72 = arith.constant 1 : index
    %c0_73 = arith.constant 0 : index
    %114 = vector.load %arg16[%c0_70, %c1_71, %c1_72, %c0_73] : memref<2x6x6x128xf32, #tpu.memory_space<vmem>>, vector<2x4x4x128xf32>
    %115 = vector.extract_strided_slice %86 {offsets = [4, 0], sizes = [1, 128], strides = [1, 1]} : vector<9x128xf32> to vector<1x128xf32>
    %116 = vector.shape_cast %115 : vector<1x128xf32> to vector<128xf32>
    %117 = vector.shape_cast %116 : vector<128xf32> to vector<1x1x1x128xf32>
    %118 = vector.broadcast %117 : vector<1x1x1x128xf32> to vector<2x4x4x128xf32>
    %119 = arith.mulf %114, %118 : vector<2x4x4x128xf32>
    %120 = arith.addf %113, %119 : vector<2x4x4x128xf32>
    %c0_74 = arith.constant 0 : index
    %c1_75 = arith.constant 1 : index
    %c2_76 = arith.constant 2 : index
    %c0_77 = arith.constant 0 : index
    %121 = vector.load %arg16[%c0_74, %c1_75, %c2_76, %c0_77] : memref<2x6x6x128xf32, #tpu.memory_space<vmem>>, vector<2x4x4x128xf32>
    %122 = vector.extract_strided_slice %86 {offsets = [5, 0], sizes = [1, 128], strides = [1, 1]} : vector<9x128xf32> to vector<1x128xf32>
    %123 = vector.shape_cast %122 : vector<1x128xf32> to vector<128xf32>
    %124 = vector.shape_cast %123 : vector<128xf32> to vector<1x1x1x128xf32>
    %125 = vector.broadcast %124 : vector<1x1x1x128xf32> to vector<2x4x4x128xf32>
    %126 = arith.mulf %121, %125 : vector<2x4x4x128xf32>
    %127 = arith.addf %120, %126 : vector<2x4x4x128xf32>
    %c0_78 = arith.constant 0 : index
    %c2_79 = arith.constant 2 : index
    %c0_80 = arith.constant 0 : index
    %c0_81 = arith.constant 0 : index
    %128 = vector.load %arg16[%c0_78, %c2_79, %c0_80, %c0_81] : memref<2x6x6x128xf32, #tpu.memory_space<vmem>>, vector<2x4x4x128xf32>
    %129 = vector.extract_strided_slice %86 {offsets = [6, 0], sizes = [1, 128], strides = [1, 1]} : vector<9x128xf32> to vector<1x128xf32>
    %130 = vector.shape_cast %129 : vector<1x128xf32> to vector<128xf32>
    %131 = vector.shape_cast %130 : vector<128xf32> to vector<1x1x1x128xf32>
    %132 = vector.broadcast %131 : vector<1x1x1x128xf32> to vector<2x4x4x128xf32>
    %133 = arith.mulf %128, %132 : vector<2x4x4x128xf32>
    %134 = arith.addf %127, %133 : vector<2x4x4x128xf32>
    %c0_82 = arith.constant 0 : index
    %c2_83 = arith.constant 2 : index
    %c1_84 = arith.constant 1 : index
    %c0_85 = arith.constant 0 : index
    %135 = vector.load %arg16[%c0_82, %c2_83, %c1_84, %c0_85] : memref<2x6x6x128xf32, #tpu.memory_space<vmem>>, vector<2x4x4x128xf32>
    %136 = vector.extract_strided_slice %86 {offsets = [7, 0], sizes = [1, 128], strides = [1, 1]} : vector<9x128xf32> to vector<1x128xf32>
    %137 = vector.shape_cast %136 : vector<1x128xf32> to vector<128xf32>
    %138 = vector.shape_cast %137 : vector<128xf32> to vector<1x1x1x128xf32>
    %139 = vector.broadcast %138 : vector<1x1x1x128xf32> to vector<2x4x4x128xf32>
    %140 = arith.mulf %135, %139 : vector<2x4x4x128xf32>
    %141 = arith.addf %134, %140 : vector<2x4x4x128xf32>
    %c0_86 = arith.constant 0 : index
    %c2_87 = arith.constant 2 : index
    %c2_88 = arith.constant 2 : index
    %c0_89 = arith.constant 0 : index
    %142 = vector.load %arg16[%c0_86, %c2_87, %c2_88, %c0_89] : memref<2x6x6x128xf32, #tpu.memory_space<vmem>>, vector<2x4x4x128xf32>
    %143 = vector.extract_strided_slice %86 {offsets = [8, 0], sizes = [1, 128], strides = [1, 1]} : vector<9x128xf32> to vector<1x128xf32>
    %144 = vector.shape_cast %143 : vector<1x128xf32> to vector<128xf32>
    %145 = vector.shape_cast %144 : vector<128xf32> to vector<1x1x1x128xf32>
    %146 = vector.broadcast %145 : vector<1x1x1x128xf32> to vector<2x4x4x128xf32>
    %147 = arith.mulf %142, %146 : vector<2x4x4x128xf32>
    %148 = arith.addf %141, %147 : vector<2x4x4x128xf32>
    %c0_90 = arith.constant 0 : index
    %c0_91 = arith.constant 0 : index
    %149 = vector.load %arg6[%c0_90, %c0_91] : memref<1x128xf32, #tpu.memory_space<vmem>>, vector<1x128xf32>
    %150 = vector.shape_cast %149 : vector<1x128xf32> to vector<1x1x1x128xf32>
    %151 = vector.broadcast %150 : vector<1x1x1x128xf32> to vector<2x4x4x128xf32>
    %152 = arith.addf %148, %151 : vector<2x4x4x128xf32>
    %153 = vector.shape_cast %152 : vector<2x4x4x128xf32> to vector<32x128xf32>
    %154 = arith.truncf %153 : vector<32x128xf32> to vector<32x128xbf16>
    %c0_92 = arith.constant 0 : index
    %c0_93 = arith.constant 0 : index
    %155 = vector.load %arg7[%c0_92, %c0_93] : memref<128x128xbf16, #tpu.memory_space<vmem>>, vector<128x128xbf16>
    %cst_94 = arith.constant dense<0.000000e+00> : vector<32x128xf32>
    %156 = tpu.matmul %154, %155, %cst_94 {dimension_numbers = #tpu.dot_dimension_numbers<[1], [0], [0], [1], [0, 0, 1, 1], [], []>} : vector<32x128xbf16>, vector<128x128xbf16>, vector<32x128xf32> -> vector<32x128xf32>
    %c0_95 = arith.constant 0 : index
    %c0_96 = arith.constant 0 : index
    %157 = vector.load %arg8[%c0_95, %c0_96] : memref<1x128xf32, #tpu.memory_space<vmem>>, vector<1x128xf32>
    %158 = vector.broadcast %157 : vector<1x128xf32> to vector<32x128xf32>
    %159 = arith.addf %156, %158 : vector<32x128xf32>
    %160 = vector.shape_cast %159 : vector<32x128xf32> to vector<2x16x128xf32>
    %c0_97 = arith.constant 0 : index
    %c0_98 = arith.constant 0 : index
    %161 = vector.load %arg9[%c0_97, %c0_98] : memref<1x128xf32, #tpu.memory_space<vmem>>, vector<1x128xf32>
    %c0_99 = arith.constant 0 : index
    %c0_100 = arith.constant 0 : index
    %162 = vector.load %arg10[%c0_99, %c0_100] : memref<1x128xf32, #tpu.memory_space<vmem>>, vector<1x128xf32>
    %cst_101 = arith.constant dense<0.000000e+00> : vector<128xf32>
    %163 = vector.multi_reduction <add>, %160, %cst_101 [0, 1] : vector<2x16x128xf32> to vector<128xf32>
    %164 = vector.shape_cast %163 : vector<128xf32> to vector<1x1x128xf32>
    %165 = arith.mulf %160, %160 : vector<2x16x128xf32>
    %cst_102 = arith.constant dense<0.000000e+00> : vector<128xf32>
    %166 = vector.multi_reduction <add>, %165, %cst_102 [0, 1] : vector<2x16x128xf32> to vector<128xf32>
    %167 = vector.shape_cast %166 : vector<128xf32> to vector<1x1x128xf32>
    %cst_103 = arith.constant 3.125000e-02 : f32
    %168 = vector.broadcast %cst_103 : f32 to vector<1x1x128xf32>
    %169 = arith.mulf %164, %168 : vector<1x1x128xf32>
    %cst_104 = arith.constant 3.125000e-02 : f32
    %170 = vector.broadcast %cst_104 : f32 to vector<1x1x128xf32>
    %171 = arith.mulf %167, %170 : vector<1x1x128xf32>
    %172 = arith.mulf %169, %169 : vector<1x1x128xf32>
    %173 = arith.subf %171, %172 : vector<1x1x128xf32>
    %cst_105 = arith.constant 0.000000e+00 : f32
    %174 = vector.broadcast %cst_105 : f32 to vector<1x1x128xf32>
    %175 = arith.maximumf %173, %174 : vector<1x1x128xf32>
    %cst_106 = arith.constant 9.99999974E-6 : f32
    %176 = vector.broadcast %cst_106 : f32 to vector<1x1x128xf32>
    %177 = arith.addf %175, %176 : vector<1x1x128xf32>
    %178 = math.rsqrt %177 : vector<1x1x128xf32>
    %179 = vector.shape_cast %161 : vector<1x128xf32> to vector<1x1x128xf32>
    %180 = arith.mulf %179, %178 : vector<1x1x128xf32>
    %181 = arith.mulf %169, %180 : vector<1x1x128xf32>
    %182 = vector.shape_cast %162 : vector<1x128xf32> to vector<1x1x128xf32>
    %183 = arith.subf %182, %181 : vector<1x1x128xf32>
    %184 = vector.broadcast %180 : vector<1x1x128xf32> to vector<2x16x128xf32>
    %185 = arith.mulf %160, %184 : vector<2x16x128xf32>
    %186 = vector.broadcast %183 : vector<1x1x128xf32> to vector<2x16x128xf32>
    %187 = arith.addf %185, %186 : vector<2x16x128xf32>
    %cst_107 = arith.constant 5.000000e-01 : f32
    %188 = vector.broadcast %cst_107 : f32 to vector<2x16x128xf32>
    %189 = arith.mulf %188, %187 : vector<2x16x128xf32>
    %cst_108 = arith.constant 0.707106769 : f32
    %190 = vector.broadcast %cst_108 : f32 to vector<2x16x128xf32>
    %191 = arith.mulf %187, %190 : vector<2x16x128xf32>
    %cst_109 = arith.constant 0.000000e+00 : f32
    %192 = vector.broadcast %cst_109 : f32 to vector<2x16x128xf32>
    %193 = arith.cmpf oge, %191, %192 : vector<2x16x128xf32>
    %cst_110 = arith.constant 1.000000e+00 : f32
    %cst_111 = arith.constant -1.000000e+00 : f32
    %194 = vector.broadcast %cst_110 : f32 to vector<2x16x128xf32>
    %195 = vector.broadcast %cst_111 : f32 to vector<2x16x128xf32>
    %196 = arith.select %193, %194, %195 : vector<2x16x128xi1>, vector<2x16x128xf32>
    %197 = math.absf %191 : vector<2x16x128xf32>
    %cst_112 = arith.constant 0.327591091 : f32
    %198 = vector.broadcast %cst_112 : f32 to vector<2x16x128xf32>
    %199 = arith.mulf %198, %197 : vector<2x16x128xf32>
    %cst_113 = arith.constant 1.000000e+00 : f32
    %200 = vector.broadcast %cst_113 : f32 to vector<2x16x128xf32>
    %201 = arith.addf %200, %199 : vector<2x16x128xf32>
    %202 = tpu.reciprocal %201 {approx = true} : vector<2x16x128xf32> -> vector<2x16x128xf32>
    %cst_114 = arith.constant 1.06140542 : f32
    %203 = vector.broadcast %cst_114 : f32 to vector<2x16x128xf32>
    %204 = arith.mulf %203, %202 : vector<2x16x128xf32>
    %cst_115 = arith.constant -1.45315206 : f32
    %205 = vector.broadcast %cst_115 : f32 to vector<2x16x128xf32>
    %206 = arith.addf %204, %205 : vector<2x16x128xf32>
    %207 = arith.mulf %206, %202 : vector<2x16x128xf32>
    %cst_116 = arith.constant 1.42141378 : f32
    %208 = vector.broadcast %cst_116 : f32 to vector<2x16x128xf32>
    %209 = arith.addf %207, %208 : vector<2x16x128xf32>
    %210 = arith.mulf %209, %202 : vector<2x16x128xf32>
    %cst_117 = arith.constant -0.284496725 : f32
    %211 = vector.broadcast %cst_117 : f32 to vector<2x16x128xf32>
    %212 = arith.addf %210, %211 : vector<2x16x128xf32>
    %213 = arith.mulf %212, %202 : vector<2x16x128xf32>
    %cst_118 = arith.constant 0.254829586 : f32
    %214 = vector.broadcast %cst_118 : f32 to vector<2x16x128xf32>
    %215 = arith.addf %213, %214 : vector<2x16x128xf32>
    %216 = arith.mulf %215, %202 : vector<2x16x128xf32>
    %cst_119 = arith.constant 0.000000e+00 : f32
    %217 = vector.broadcast %cst_119 : f32 to vector<2x16x128xf32>
    %218 = arith.subf %217, %197 : vector<2x16x128xf32>
    %219 = arith.mulf %218, %197 : vector<2x16x128xf32>
    %220 = math.exp %219 : vector<2x16x128xf32>
    %221 = arith.mulf %216, %220 : vector<2x16x128xf32>
    %cst_120 = arith.constant 1.000000e+00 : f32
    %222 = vector.broadcast %cst_120 : f32 to vector<2x16x128xf32>
    %223 = arith.subf %222, %221 : vector<2x16x128xf32>
    %224 = arith.mulf %196, %223 : vector<2x16x128xf32>
    %cst_121 = arith.constant 1.000000e+00 : f32
    %225 = vector.broadcast %cst_121 : f32 to vector<2x16x128xf32>
    %226 = arith.addf %225, %224 : vector<2x16x128xf32>
    %227 = arith.mulf %189, %226 : vector<2x16x128xf32>
    %228 = vector.shape_cast %227 : vector<2x16x128xf32> to vector<32x128xf32>
    %229 = arith.truncf %228 : vector<32x128xf32> to vector<32x128xbf16>
    %c0_122 = arith.constant 0 : index
    %c0_123 = arith.constant 0 : index
    %230 = vector.load %arg11[%c0_122, %c0_123] : memref<128x128xbf16, #tpu.memory_space<vmem>>, vector<128x128xbf16>
    %cst_124 = arith.constant dense<0.000000e+00> : vector<32x128xf32>
    %231 = tpu.matmul %229, %230, %cst_124 {dimension_numbers = #tpu.dot_dimension_numbers<[1], [0], [0], [1], [0, 0, 1, 1], [], []>} : vector<32x128xbf16>, vector<128x128xbf16>, vector<32x128xf32> -> vector<32x128xf32>
    %c0_125 = arith.constant 0 : index
    %c0_126 = arith.constant 0 : index
    %232 = vector.load %arg12[%c0_125, %c0_126] : memref<1x128xf32, #tpu.memory_space<vmem>>, vector<1x128xf32>
    %233 = vector.broadcast %232 : vector<1x128xf32> to vector<32x128xf32>
    %234 = arith.addf %231, %233 : vector<32x128xf32>
    %235 = vector.shape_cast %234 : vector<32x128xf32> to vector<2x16x128xf32>
    %c0_127 = arith.constant 0 : index
    %c0_128 = arith.constant 0 : index
    %236 = vector.load %arg13[%c0_127, %c0_128] : memref<16x1xf32, #tpu.memory_space<vmem>>, vector<16x1xf32>
    %c0_129 = arith.constant 0 : index
    %c0_130 = arith.constant 0 : index
    %237 = vector.load %arg14[%c0_129, %c0_130] : memref<16x1xf32, #tpu.memory_space<vmem>>, vector<16x1xf32>
    %cst_131 = arith.constant dense<0.000000e+00> : vector<16xf32>
    %238 = vector.multi_reduction <add>, %235, %cst_131 [0, 2] : vector<2x16x128xf32> to vector<16xf32>
    %239 = vector.shape_cast %238 : vector<16xf32> to vector<1x16x1xf32>
    %240 = arith.mulf %235, %235 : vector<2x16x128xf32>
    %cst_132 = arith.constant dense<0.000000e+00> : vector<16xf32>
    %241 = vector.multi_reduction <add>, %240, %cst_132 [0, 2] : vector<2x16x128xf32> to vector<16xf32>
    %242 = vector.shape_cast %241 : vector<16xf32> to vector<1x16x1xf32>
    %cst_133 = arith.constant 6.250000e-02 : f32
    %243 = vector.broadcast %cst_133 : f32 to vector<1x16x1xf32>
    %244 = arith.mulf %239, %243 : vector<1x16x1xf32>
    %cst_134 = arith.constant 6.250000e-02 : f32
    %245 = vector.broadcast %cst_134 : f32 to vector<1x16x1xf32>
    %246 = arith.mulf %242, %245 : vector<1x16x1xf32>
    %247 = arith.mulf %244, %244 : vector<1x16x1xf32>
    %248 = arith.subf %246, %247 : vector<1x16x1xf32>
    %cst_135 = arith.constant 0.000000e+00 : f32
    %249 = vector.broadcast %cst_135 : f32 to vector<1x16x1xf32>
    %250 = arith.maximumf %248, %249 : vector<1x16x1xf32>
    %cst_136 = arith.constant 9.99999974E-6 : f32
    %251 = vector.broadcast %cst_136 : f32 to vector<1x16x1xf32>
    %252 = arith.addf %250, %251 : vector<1x16x1xf32>
    %253 = math.rsqrt %252 : vector<1x16x1xf32>
    %254 = vector.shape_cast %236 : vector<16x1xf32> to vector<1x16x1xf32>
    %255 = arith.mulf %254, %253 : vector<1x16x1xf32>
    %256 = arith.mulf %244, %255 : vector<1x16x1xf32>
    %257 = vector.shape_cast %237 : vector<16x1xf32> to vector<1x16x1xf32>
    %258 = arith.subf %257, %256 : vector<1x16x1xf32>
    %259 = vector.broadcast %255 : vector<1x16x1xf32> to vector<2x16x128xf32>
    %260 = arith.mulf %235, %259 : vector<2x16x128xf32>
    %261 = vector.broadcast %258 : vector<1x16x1xf32> to vector<2x16x128xf32>
    %262 = arith.addf %260, %261 : vector<2x16x128xf32>
    %cst_137 = arith.constant 5.000000e-01 : f32
    %263 = vector.broadcast %cst_137 : f32 to vector<2x16x128xf32>
    %264 = arith.mulf %263, %262 : vector<2x16x128xf32>
    %cst_138 = arith.constant 0.707106769 : f32
    %265 = vector.broadcast %cst_138 : f32 to vector<2x16x128xf32>
    %266 = arith.mulf %262, %265 : vector<2x16x128xf32>
    %cst_139 = arith.constant 0.000000e+00 : f32
    %267 = vector.broadcast %cst_139 : f32 to vector<2x16x128xf32>
    %268 = arith.cmpf oge, %266, %267 : vector<2x16x128xf32>
    %cst_140 = arith.constant 1.000000e+00 : f32
    %cst_141 = arith.constant -1.000000e+00 : f32
    %269 = vector.broadcast %cst_140 : f32 to vector<2x16x128xf32>
    %270 = vector.broadcast %cst_141 : f32 to vector<2x16x128xf32>
    %271 = arith.select %268, %269, %270 : vector<2x16x128xi1>, vector<2x16x128xf32>
    %272 = math.absf %266 : vector<2x16x128xf32>
    %cst_142 = arith.constant 0.327591091 : f32
    %273 = vector.broadcast %cst_142 : f32 to vector<2x16x128xf32>
    %274 = arith.mulf %273, %272 : vector<2x16x128xf32>
    %cst_143 = arith.constant 1.000000e+00 : f32
    %275 = vector.broadcast %cst_143 : f32 to vector<2x16x128xf32>
    %276 = arith.addf %275, %274 : vector<2x16x128xf32>
    %277 = tpu.reciprocal %276 {approx = true} : vector<2x16x128xf32> -> vector<2x16x128xf32>
    %cst_144 = arith.constant 1.06140542 : f32
    %278 = vector.broadcast %cst_144 : f32 to vector<2x16x128xf32>
    %279 = arith.mulf %278, %277 : vector<2x16x128xf32>
    %cst_145 = arith.constant -1.45315206 : f32
    %280 = vector.broadcast %cst_145 : f32 to vector<2x16x128xf32>
    %281 = arith.addf %279, %280 : vector<2x16x128xf32>
    %282 = arith.mulf %281, %277 : vector<2x16x128xf32>
    %cst_146 = arith.constant 1.42141378 : f32
    %283 = vector.broadcast %cst_146 : f32 to vector<2x16x128xf32>
    %284 = arith.addf %282, %283 : vector<2x16x128xf32>
    %285 = arith.mulf %284, %277 : vector<2x16x128xf32>
    %cst_147 = arith.constant -0.284496725 : f32
    %286 = vector.broadcast %cst_147 : f32 to vector<2x16x128xf32>
    %287 = arith.addf %285, %286 : vector<2x16x128xf32>
    %288 = arith.mulf %287, %277 : vector<2x16x128xf32>
    %cst_148 = arith.constant 0.254829586 : f32
    %289 = vector.broadcast %cst_148 : f32 to vector<2x16x128xf32>
    %290 = arith.addf %288, %289 : vector<2x16x128xf32>
    %291 = arith.mulf %290, %277 : vector<2x16x128xf32>
    %cst_149 = arith.constant 0.000000e+00 : f32
    %292 = vector.broadcast %cst_149 : f32 to vector<2x16x128xf32>
    %293 = arith.subf %292, %272 : vector<2x16x128xf32>
    %294 = arith.mulf %293, %272 : vector<2x16x128xf32>
    %295 = math.exp %294 : vector<2x16x128xf32>
    %296 = arith.mulf %291, %295 : vector<2x16x128xf32>
    %cst_150 = arith.constant 1.000000e+00 : f32
    %297 = vector.broadcast %cst_150 : f32 to vector<2x16x128xf32>
    %298 = arith.subf %297, %296 : vector<2x16x128xf32>
    %299 = arith.mulf %271, %298 : vector<2x16x128xf32>
    %cst_151 = arith.constant 1.000000e+00 : f32
    %300 = vector.broadcast %cst_151 : f32 to vector<2x16x128xf32>
    %301 = arith.addf %300, %299 : vector<2x16x128xf32>
    %302 = arith.mulf %264, %301 : vector<2x16x128xf32>
    %c0_152 = arith.constant 0 : index
    %c0_153 = arith.constant 0 : index
    %c0_154 = arith.constant 0 : index
    %303 = vector.load %arg15[%c0_152, %c0_153, %c0_154] : memref<2x16x128xf32, #tpu.memory_space<vmem>>, vector<2x16x128xf32>
    tpu.vector_store %arg15[%c0_152, %c0_153, %c0_154], %302 {strides = array<i32>} : memref<2x16x128xf32, #tpu.memory_space<vmem>>, vector<2x16x128xf32>,
    return
  }
}

</mosaic_0001>

<llo_original>
// kernel: tpu_custom_call.1
$region0: #{tpu_custom_call.1}
  #allocation0 [shape = 'u32[]', space=smem, size = 0x4, offset = 0x4, fixed_abs, tag = 'smem constant byte address 0x4 - core index']
  #allocation1 [shape = 'u32[144,128]{1,0:T(1,128)}', space=vmem, size = 0x12000, scoped, tag = 'internal scratch']
  #allocation2 [shape = 'f32[2,6,6,128]{3,2,1,0:T(8,128)}', space=vmem, size = 0xc000, scoped, tag = 'scratch operand']
  %s0 = inlined_call_operand.hbm [shape: f32[2,16,128], index: 0, kind: input, shape index: {}]
  %s1 = inlined_call_operand.vmem [shape: bf16[128,128], index: 1, kind: input, shape index: {}]
  %s2 = inlined_call_operand.vmem [shape: f32[1,128], index: 2, kind: input, shape index: {}]
  %s3 = inlined_call_operand.vmem [shape: f32[16,1], index: 3, kind: input, shape index: {}]
  %s4 = inlined_call_operand.vmem [shape: f32[16,1], index: 4, kind: input, shape index: {}]
  %s5 = inlined_call_operand.vmem [shape: f32[9,128], index: 5, kind: input, shape index: {}]
  %s6 = inlined_call_operand.vmem [shape: f32[1,128], index: 6, kind: input, shape index: {}]
  %s7 = inlined_call_operand.hbm [shape: bf16[128,128], index: 7, kind: input, shape index: {}]
  %s8 = inlined_call_operand.vmem [shape: f32[1,128], index: 8, kind: input, shape index: {}]
  %s9 = inlined_call_operand.vmem [shape: f32[1,128], index: 9, kind: input, shape index: {}]
  %s10 = inlined_call_operand.vmem [shape: f32[1,128], index: 10, kind: input, shape index: {}]
  %s11 = inlined_call_operand.hbm [shape: bf16[128,128], index: 11, kind: input, shape index: {}]
  %s12 = inlined_call_operand.vmem [shape: f32[1,128], index: 12, kind: input, shape index: {}]
  %s13 = inlined_call_operand.vmem [shape: f32[16,1], index: 13, kind: input, shape index: {}]
  %s14 = inlined_call_operand.vmem [shape: f32[16,1], index: 14, kind: input, shape index: {}]
  %s15 = inlined_call_operand.hbm [shape: f32[2,16,128], index: 15, kind: output, shape index: {}]
  %s16 = sld [smem:[#allocation0]]
  $region82: #{tpu_custom_call.1} parent=0
    _
  %s18 = ssub.s32 1, %s16
  %s19 = scalar_select 0, %s18, %s16
  $region1: #{tpu_custom_call.1} parent=0
    #allocation3 [shape = 'u8[16384]{0}', space=vmem, size = 0x4000, scoped, tag = 'input window, operand 0, single buffered']
    #allocation4 [shape = 's32[1]{0}', space=sflag, size = 0x4, scoped, tag = 'scoped memory for tpu_custom_call.1']
    #allocation5 [shape = 's32[1]{0}', space=sflag, size = 0x4, scoped, tag = 'scoped memory for tpu_custom_call.1']
    #allocation6 [shape = 'u8[32768]{0}', space=vmem, size = 0x8000, scoped, tag = 'input window, operand 7, single buffered']
    #allocation7 [shape = 's32[1]{0}', space=sflag, size = 0x4, scoped, tag = 'scoped memory for tpu_custom_call.1']
    #allocation8 [shape = 'u8[32768]{0}', space=vmem, size = 0x8000, scoped, tag = 'input window, operand 11, single buffered']
    #allocation9 [shape = 'u8[16384]{0}', space=vmem, size = 0x4000, scoped, tag = 'output window, operand 0, single buffered']
    %20 = vsyncpa [#allocation4], 0
    %21 = vsyncpa [#allocation7], 0
    %22 = vsyncpa [#allocation5], 0
    // Predicated region
    $region2: #{tpu_custom_call.1} parent=1 // pred_check
      _
    $region3: #{tpu_custom_call.1} parent=1 // pred_check_branch
      %24 = sbr.rel (0) target = $region5
    $region4: #{tpu_custom_call.1} parent=1 // pred_region
      %s26 = ssub.s32 512, 512
      %27 = vsyncadd [#allocation4], %s26
      %s28 = sshll.u32 [#allocation3], 4
      %s29 = int_to_ptr.vmem [resolvable:$true] %s28
      %34 = dma.hbm_to_vmem [thread:$0]  %s0, 512, %s29, [#allocation4], 128, 128, 8
    $region5: #{tpu_custom_call.1} parent=1 // pred_fallthru
      _
    // Predicated region
    $region6: #{tpu_custom_call.1} parent=1 // pred_check
      _
    $region7: #{tpu_custom_call.1} parent=1 // pred_check_branch
      %36 = sbr.rel (0) target = $region9
    $region8: #{tpu_custom_call.1} parent=1 // pred_region
      _
    $region9: #{tpu_custom_call.1} parent=1 // pred_fallthru
      _
    // Predicated region
    $region10: #{tpu_custom_call.1} parent=1 // pred_check
      _
    $region11: #{tpu_custom_call.1} parent=1 // pred_check_branch
      %38 = sbr.rel (0) target = $region13
    $region12: #{tpu_custom_call.1} parent=1 // pred_region
      _
    $region13: #{tpu_custom_call.1} parent=1 // pred_fallthru
      _
    // Predicated region
    $region14: #{tpu_custom_call.1} parent=1 // pred_check
      _
    $region15: #{tpu_custom_call.1} parent=1 // pred_check_branch
      %40 = sbr.rel (0) target = $region17
    $region16: #{tpu_custom_call.1} parent=1 // pred_region
      _
    $region17: #{tpu_custom_call.1} parent=1 // pred_fallthru
      _
    // Predicated region
    $region18: #{tpu_custom_call.1} parent=1 // pred_check
      _
    $region19: #{tpu_custom_call.1} parent=1 // pred_check_branch
      %42 = sbr.rel (0) target = $region21
    $region20: #{tpu_custom_call.1} parent=1 // pred_region
      _
    $region21: #{tpu_custom_call.1} parent=1 // pred_fallthru
      _
    // Predicated region
    $region22: #{tpu_custom_call.1} parent=1 // pred_check
      _
    $region23: #{tpu_custom_call.1} parent=1 // pred_check_branch
      %44 = sbr.rel (0) target = $region25
    $region24: #{tpu_custom_call.1} parent=1 // pred_region
      _
    $region25: #{tpu_custom_call.1} parent=1 // pred_fallthru
      _
    // Predicated region
    $region26: #{tpu_custom_call.1} parent=1 // pred_check
      _
    $region27: #{tpu_custom_call.1} parent=1 // pred_check_branch
      %46 = sbr.rel (0) target = $region29
    $region28: #{tpu_custom_call.1} parent=1 // pred_region
      _
    $region29: #{tpu_custom_call.1} parent=1 // pred_fallthru
      _
    // Predicated region
    $region30: #{tpu_custom_call.1} parent=1 // pred_check
      _
    $region31: #{tpu_custom_call.1} parent=1 // pred_check_branch
      %48 = sbr.rel (0) target = $region33
    $region32: #{tpu_custom_call.1} parent=1 // pred_region
      %s50 = ssub.s32 1024, 1024
      %51 = vsyncadd [#allocation7], %s50
      %s52 = sshll.u32 [#allocation6], 4
      %s53 = int_to_ptr.vmem [resolvable:$true] %s52
      %58 = dma.hbm_to_vmem [thread:$0]  %s7, 1024, %s53, [#allocation7], 64, 64, 4
    $region33: #{tpu_custom_call.1} parent=1 // pred_fallthru
      _
    // Predicated region
    $region34: #{tpu_custom_call.1} parent=1 // pred_check
      _
    $region35: #{tpu_custom_call.1} parent=1 // pred_check_branch
      %60 = sbr.rel (0) target = $region37
    $region36: #{tpu_custom_call.1} parent=1 // pred_region
      _
    $region37: #{tpu_custom_call.1} parent=1 // pred_fallthru
      _
    // Predicated region
    $region38: #{tpu_custom_call.1} parent=1 // pred_check
      _
    $region39: #{tpu_custom_call.1} parent=1 // pred_check_branch
      %62 = sbr.rel (0) target = $region41
    $region40: #{tpu_custom_call.1} parent=1 // pred_region
      _
    $region41: #{tpu_custom_call.1} parent=1 // pred_fallthru
      _
    // Predicated region
    $region42: #{tpu_custom_call.1} parent=1 // pred_check
      _
    $region43: #{tpu_custom_call.1} parent=1 // pred_check_branch
      %64 = sbr.rel (0) target = $region45
    $region44: #{tpu_custom_call.1} parent=1 // pred_region
      _
    $region45: #{tpu_custom_call.1} parent=1 // pred_fallthru
      _
    // Predicated region
    $region46: #{tpu_custom_call.1} parent=1 // pred_check
      _
    $region47: #{tpu_custom_call.1} parent=1 // pred_check_branch
      %66 = sbr.rel (0) target = $region49
    $region48: #{tpu_custom_call.1} parent=1 // pred_region
      %s68 = ssub.s32 1024, 1024
      %69 = vsyncadd [#allocation7], %s68
      %s70 = sshll.u32 [#allocation8], 4
      %s71 = int_to_ptr.vmem [resolvable:$true] %s70
      %76 = dma.hbm_to_vmem [thread:$0]  %s11, 1024, %s71, [#allocation7], 64, 64, 4
    $region49: #{tpu_custom_call.1} parent=1 // pred_fallthru
      _
    // Predicated region
    $region50: #{tpu_custom_call.1} parent=1 // pred_check
      _
    $region51: #{tpu_custom_call.1} parent=1 // pred_check_branch
      %78 = sbr.rel (0) target = $region53
    $region52: #{tpu_custom_call.1} parent=1 // pred_region
      _
    $region53: #{tpu_custom_call.1} parent=1 // pred_fallthru
      _
    // Predicated region
    $region54: #{tpu_custom_call.1} parent=1 // pred_check
      _
    $region55: #{tpu_custom_call.1} parent=1 // pred_check_branch
      %80 = sbr.rel (0) target = $region57
    $region56: #{tpu_custom_call.1} parent=1 // pred_region
      _
    $region57: #{tpu_custom_call.1} parent=1 // pred_fallthru
      _
    // Predicated region
    $region58: #{tpu_custom_call.1} parent=1 // pred_check
      _
    $region59: #{tpu_custom_call.1} parent=1 // pred_check_branch
      %82 = sbr.rel (0) target = $region61
    $region60: #{tpu_custom_call.1} parent=1 // pred_region
      _
    $region61: #{tpu_custom_call.1} parent=1 // pred_fallthru
      _
    // Predicated region
    $region62: #{tpu_custom_call.1} parent=1 // pred_check
      _
    $region63: #{tpu_custom_call.1} parent=1 // pred_check_branch
      %84 = sbr.rel (0) target = $region65
    $region64: #{tpu_custom_call.1} parent=1 // pred_region
      %85 = dma.done [#allocation4], 512
    $region65: #{tpu_custom_call.1} parent=1 // pred_fallthru
      _
    // Predicated region
    $region66: #{tpu_custom_call.1} parent=1 // pred_check
      _
    $region67: #{tpu_custom_call.1} parent=1 // pred_check_branch
      %87 = sbr.rel (0) target = $region69
    $region68: #{tpu_custom_call.1} parent=1 // pred_region
      %88 = dma.done [#allocation7], 1024
    $region69: #{tpu_custom_call.1} parent=1 // pred_fallthru
      _
    // Predicated region
    $region70: #{tpu_custom_call.1} parent=1 // pred_check
      _
    $region71: #{tpu_custom_call.1} parent=1 // pred_check_branch
      %90 = sbr.rel (0) target = $region73
    $region72: #{tpu_custom_call.1} parent=1 // pred_region
      %91 = dma.done [#allocation7], 1024
    $region73: #{tpu_custom_call.1} parent=1 // pred_fallthru
      _
    %v93 = vld [vmem:[#allocation3] sm:$0xff]
    %v94 = vld [vmem:[#allocation3 + $0x8] sm:$0xff]
    %v95 = vld [vmem:[#allocation3 + $0x10] sm:$0xff]
    %v96 = vld [vmem:[#allocation3 + $0x18] sm:$0xff]
    %v97 = vpack.c.bf16 %v94, %v93
    %v98 = vpack.c.bf16 %v96, %v95
    %v99 = vld [vmem:[%s1] sm:$0xf]
    %v100 = vld [vmem:[%s1 + $0x4] sm:$0xf]
    %v101 = vld [vmem:[%s1 + $0x8] sm:$0xf]
    %v102 = vld [vmem:[%s1 + $0xc] sm:$0xf]
    %v103 = vld [vmem:[%s1 + $0x10] sm:$0xf]
    %v104 = vld [vmem:[%s1 + $0x14] sm:$0xf]
    %v105 = vld [vmem:[%s1 + $0x18] sm:$0xf]
    %v106 = vld [vmem:[%s1 + $0x1c] sm:$0xf]
    %v107 = vld [vmem:[%s1 + $0x20] sm:$0xf]
    %v108 = vld [vmem:[%s1 + $0x24] sm:$0xf]
    %v109 = vld [vmem:[%s1 + $0x28] sm:$0xf]
    %v110 = vld [vmem:[%s1 + $0x2c] sm:$0xf]
    %v111 = vld [vmem:[%s1 + $0x30] sm:$0xf]
    %v112 = vld [vmem:[%s1 + $0x34] sm:$0xf]
    %v113 = vld [vmem:[%s1 + $0x38] sm:$0xf]
    %v114 = vld [vmem:[%s1 + $0x3c] sm:$0xf]
    %v115 = vld [vmem:[%s2] sm:$0x1]
    %v117 = vlaneseq
    %v118 = vshrl.u32 %v117, 7
    %v119 = vsub.s32 0, %v118
    %v120 = vrot.slane %v115, %v119
    %v138 = vunpack.c.l.b16 %v99
    %v139 = vunpack.c.l.b16 %v100
    %v140 = vunpack.c.l.b16 %v101
    %v141 = vunpack.c.l.b16 %v102
    %v142 = vunpack.c.l.b16 %v103
    %v143 = vunpack.c.l.b16 %v104
    %v144 = vunpack.c.l.b16 %v105
    %v145 = vunpack.c.l.b16 %v106
    %v146 = vunpack.c.l.b16 %v107
    %v147 = vunpack.c.l.b16 %v108
    %v148 = vunpack.c.l.b16 %v109
    %v149 = vunpack.c.l.b16 %v110
    %v150 = vunpack.c.l.b16 %v111
    %v151 = vunpack.c.l.b16 %v112
    %v152 = vunpack.c.l.b16 %v113
    %v153 = vunpack.c.l.b16 %v114
    %v154 = vpack.c.b16 %v139, %v138
    %v155 = vpack.c.b16 %v141, %v140
    %v156 = vpack.c.b16 %v143, %v142
    %v157 = vpack.c.b16 %v145, %v144
    %v158 = vpack.c.b16 %v147, %v146
    %v159 = vpack.c.b16 %v149, %v148
    %v160 = vpack.c.b16 %v151, %v150
    %v161 = vpack.c.b16 %v153, %v152
    %170 = vmatprep.subr.bf16.mxu0 0
    %171 = vmatpush1.bf16.msra.mxu0 %v154
    %172 = vmatprep.subr.bf16.mxu0 0
    %173 = vmatpush1.bf16.msra.mxu0 %v155
    %174 = vmatprep.subr.bf16.mxu0 0
    %175 = vmatpush1.bf16.msra.mxu0 %v156
    %176 = vmatprep.subr.bf16.mxu0 0
    %177 = vmatpush1.bf16.msra.mxu0 %v157
    %178 = vmatprep.subr.bf16.mxu0 0
    %179 = vmatpush1.bf16.msra.mxu0 %v158
    %180 = vmatprep.subr.bf16.mxu0 0
    %181 = vmatpush1.bf16.msra.mxu0 %v159
    %182 = vmatprep.subr.bf16.mxu0 0
    %183 = vmatpush1.bf16.msra.mxu0 %v160
    %184 = vmatprep.subr.bf16.mxu0 0
    %185 = vmatpush1.bf16.msra.mxu0 %v161
    %186 = vmatprep.subr.bf16.mxu0 0
    %187 = vmatpush1.bf16.msra.mxu0 0
    %188 = vmatprep.subr.bf16.mxu0 0
    %189 = vmatpush1.bf16.msra.mxu0 0
    %190 = vmatprep.subr.bf16.mxu0 0
    %191 = vmatpush1.bf16.msra.mxu0 0
    %192 = vmatprep.subr.bf16.mxu0 0
    %193 = vmatpush1.bf16.msra.mxu0 0
    %194 = vmatprep.subr.bf16.mxu0 0
    %195 = vmatpush1.bf16.msra.mxu0 0
    %196 = vmatprep.subr.bf16.mxu0 0
    %197 = vmatpush1.bf16.msra.mxu0 0
    %198 = vmatprep.subr.bf16.mxu0 0
    %199 = vmatpush1.bf16.msra.mxu0 0
    %200 = vmatprep.subr.bf16.mxu0 0
    %201 = vmatpush1.bf16.msra.mxu0 0
    %202 = vmatprep.mubr.bf16.mxu0 0
    %203 = vmatmul.mubr.bf16.gmra.mrb[0].mxu0 %v97
    %v204 = vpop.f32.mrb[0].mxu0
    %v205 = vadd.f32 %v120, %v204
    %v206 = vpop.f32.mrb[0].mxu0
    %v207 = vpop.f32.mrb[0].mxu0
    %v208 = vadd.f32 %v120, %v207
    %v209 = vpop.f32.mrb[0].mxu0
    %210 = vmatprep.mubr.bf16.mxu0 0
    %211 = vmatmul.mubr.bf16.gmra.mrb[0].mxu0 %v98
    %v212 = vpop.f32.mrb[0].mxu0
    %v213 = vadd.f32 %v120, %v212
    %v214 = vpop.f32.mrb[0].mxu0
    %v215 = vpop.f32.mrb[0].mxu0
    %v216 = vadd.f32 %v120, %v215
    %v217 = vpop.f32.mrb[0].mxu0
    %218 = vdwg.mxu0
    %v219 = vld [vmem:[%s3] sm:$0xff]
    %v220 = vld [vmem:[%s3 + $0x8] sm:$0xff]
    %v221 = vld [vmem:[%s4] sm:$0xff]
    %v222 = vld [vmem:[%s4 + $0x8] sm:$0xff]
    %v223 = vadd.f32 %v205, %v213
    %224 = vadd.xlane.f32.xlu0 %v223
    %v225 = vpop.xlane.xlu0 %224
    %v226 = vadd.f32 %v208, %v216
    %227 = vadd.xlane.f32.xlu0 %v226
    %v228 = vpop.xlane.xlu0 %227
    %v229 = vmul.f32 %v205, %v205
    %v230 = vmul.f32 %v208, %v208
    %v231 = vmul.f32 %v213, %v213
    %v232 = vmul.f32 %v216, %v216
    %v233 = vadd.f32 %v229, %v231
    %234 = vadd.xlane.f32.xlu0 %v233
    %v235 = vpop.xlane.xlu0 %234
    %v236 = vadd.f32 %v230, %v232
    %237 = vadd.xlane.f32.xlu0 %v236
    %v238 = vpop.xlane.xlu0 %237
    %v239 = vmul.f32 %v225, 0.015625
    %v240 = vmul.f32 %v228, 0.015625
    %v241 = vmul.f32 %v235, 0.015625
    %v242 = vmul.f32 %v238, 0.015625
    %v243 = vmul.f32 %v239, %v239
    %v244 = vmul.f32 %v240, %v240
    %v245 = vsub.f32 %v241, %v243
    %v246 = vsub.f32 %v242, %v244
    %v247 = vmax.f32 %v245, 0.0
    %v248 = vmax.f32 %v246, 0.0
    %v249 = vadd.f32 %v247, 1e-05
    %v250 = vadd.f32 %v248, 1e-05
    %v251 = vrsqrt.pop %v249
    %v252 = vrsqrt.pop %v250
    %v253 = vmul.f32 %v219, %v251
    %v254 = vmul.f32 %v220, %v252
    %v255 = vmul.f32 %v239, %v253
    %v256 = vmul.f32 %v240, %v254
    %v257 = vsub.f32 %v221, %v255
    %v258 = vsub.f32 %v222, %v256
    %260 = vset.pattern.permute.xlu0 0
    %261 = vperm.xlu0 %260, %v253
    %v262 = vpop.permute.xlu0 %261
    %265 = vset.pattern.permute.xlu0 0
    %266 = vperm.xlu0 %265, %v254
    %v267 = vpop.permute.xlu0 %266
    %v269 = vmul.f32 %v205, %v262
    %v270 = vmul.f32 %v208, %v267
    %v271 = vmul.f32 %v213, %v262
    %v272 = vmul.f32 %v216, %v267
    %274 = vset.pattern.permute.xlu0 0
    %275 = vperm.xlu0 %274, %v257
    %v276 = vpop.permute.xlu0 %275
    %279 = vset.pattern.permute.xlu0 0
    %280 = vperm.xlu0 %279, %v258
    %v281 = vpop.permute.xlu0 %280
    %v283 = vadd.f32 %v269, %v276
    %v284 = vadd.f32 %v270, %v281
    %v285 = vadd.f32 %v271, %v276
    %v286 = vadd.f32 %v272, %v281
    %v287 = vmul.f32 %v283, 0.5
    %v288 = vmul.f32 %v284, 0.5
    %v289 = vmul.f32 %v285, 0.5
    %v290 = vmul.f32 %v286, 0.5
    %v291 = vmul.f32 %v283, 0.70710677
    %v292 = vmul.f32 %v284, 0.70710677
    %v293 = vmul.f32 %v285, 0.70710677
    %v294 = vmul.f32 %v286, 0.70710677
    %vm295 = vcmp.ge.f32.partialorder %v291, 0.0
    %vm296 = vcmp.ge.f32.partialorder %v292, 0.0
    %vm297 = vcmp.ge.f32.partialorder %v293, 0.0
    %vm298 = vcmp.ge.f32.partialorder %v294, 0.0
    %v299 = vsel %vm295, 1.0, -1.0
    %v300 = vsel %vm296, 1.0, -1.0
    %v301 = vsel %vm297, 1.0, -1.0
    %v302 = vsel %vm298, 1.0, -1.0
    %v303 = vand.u32 2147483647, %v291
    %v304 = vand.u32 2147483647, %v292
    %v305 = vand.u32 2147483647, %v293
    %v306 = vand.u32 2147483647, %v294
    %v307 = vmul.f32 %v303, 0.3275911
    %v308 = vmul.f32 %v304, 0.3275911
    %v309 = vmul.f32 %v305, 0.3275911
    %v310 = vmul.f32 %v306, 0.3275911
    %v311 = vadd.f32 %v307, 1.0
    %v312 = vadd.f32 %v308, 1.0
    %v313 = vadd.f32 %v309, 1.0
    %v314 = vadd.f32 %v310, 1.0
    %v315 = vrcp.pop %v311
    %v316 = vrcp.pop %v312
    %v317 = vrcp.pop %v313
    %v318 = vrcp.pop %v314
    %v319 = vmul.f32 %v315, 1.0614054
    %v320 = vmul.f32 %v316, 1.0614054
    %v321 = vmul.f32 %v317, 1.0614054
    %v322 = vmul.f32 %v318, 1.0614054
    %v323 = vadd.f32 %v319, -1.4531521
    %v324 = vadd.f32 %v320, -1.4531521
    %v325 = vadd.f32 %v321, -1.4531521
    %v326 = vadd.f32 %v322, -1.4531521
    %v327 = vmul.f32 %v323, %v315
    %v328 = vmul.f32 %v324, %v316
    %v329 = vmul.f32 %v325, %v317
    %v330 = vmul.f32 %v326, %v318
    %v331 = vadd.f32 %v327, 1.4214138
    %v332 = vadd.f32 %v328, 1.4214138
    %v333 = vadd.f32 %v329, 1.4214138
    %v334 = vadd.f32 %v330, 1.4214138
    %v335 = vmul.f32 %v331, %v315
    %v336 = vmul.f32 %v332, %v316
    %v337 = vmul.f32 %v333, %v317
    %v338 = vmul.f32 %v334, %v318
    %v339 = vadd.f32 %v335, -0.28449672
    %v340 = vadd.f32 %v336, -0.28449672
    %v341 = vadd.f32 %v337, -0.28449672
    %v342 = vadd.f32 %v338, -0.28449672
    %v343 = vmul.f32 %v339, %v315
    %v344 = vmul.f32 %v340, %v316
    %v345 = vmul.f32 %v341, %v317
    %v346 = vmul.f32 %v342, %v318
    %v347 = vadd.f32 %v343, 0.2548296
    %v348 = vadd.f32 %v344, 0.2548296
    %v349 = vadd.f32 %v345, 0.2548296
    %v350 = vadd.f32 %v346, 0.2548296
    %v351 = vmul.f32 %v347, %v315
    %v352 = vmul.f32 %v348, %v316
    %v353 = vmul.f32 %v349, %v317
    %v354 = vmul.f32 %v350, %v318
    %v355 = vsub.f32 0.0, %v303
    %v356 = vsub.f32 0.0, %v304
    %v357 = vsub.f32 0.0, %v305
    %v358 = vsub.f32 0.0, %v306
    %v359 = vmul.f32 %v355, %v303
    %v360 = vmul.f32 %v356, %v304
    %v361 = vmul.f32 %v357, %v305
    %v362 = vmul.f32 %v358, %v306
    %v363 = vmul.f32 %v359, 1.442695
    %v364 = vpow.pop %v363
    %v365 = vmul.f32 %v360, 1.442695
    %v366 = vpow.pop %v365
    %v367 = vmul.f32 %v361, 1.442695
    %v368 = vpow.pop %v367
    %v369 = vmul.f32 %v362, 1.442695
    %v370 = vpow.pop %v369
    %v371 = vmul.f32 %v351, %v364
    %v372 = vmul.f32 %v352, %v366
    %v373 = vmul.f32 %v353, %v368
    %v374 = vmul.f32 %v354, %v370
    %v375 = vsub.f32 1.0, %v371
    %v376 = vsub.f32 1.0, %v372
    %v377 = vsub.f32 1.0, %v373
    %v378 = vsub.f32 1.0, %v374
    %v379 = vmul.f32 %v299, %v375
    %v380 = vmul.f32 %v300, %v376
    %v381 = vmul.f32 %v301, %v377
    %v382 = vmul.f32 %v302, %v378
    %v383 = vadd.f32 %v379, 1.0
    %v384 = vadd.f32 %v380, 1.0
    %v385 = vadd.f32 %v381, 1.0
    %v386 = vadd.f32 %v382, 1.0
    %v387 = vmul.f32 %v287, %v383
    %v388 = vmul.f32 %v288, %v384
    %v389 = vmul.f32 %v289, %v385
    %v390 = vmul.f32 %v290, %v386
    %391 = vst [vmem:[#allocation2] sm:$0x3f] 0.0
    %392 = vst [vmem:[#allocation2 + $0x30] sm:$0x3f] 0.0
    %s393 = scalar_lea.vmem [#allocation2], 40
    %394 = vst [vmem:[%s393] sm:$0x3f] 0.0
    %395 = vst [vmem:[%s393 + $0x30] sm:$0x3f] 0.0
    %s396 = scalar_lea.vmem [#allocation2], 8
    %397 = vst [vmem:[%s396] sm:$0x1] 0.0
    %398 = vst [vmem:[%s396 + $0x8] sm:$0x1] 0.0
    %399 = vst [vmem:[%s396 + $0x10] sm:$0x1] 0.0
    %400 = vst [vmem:[%s396 + $0x18] sm:$0x1] 0.0
    %401 = vst [vmem:[%s396 + $0x30] sm:$0x1] 0.0
    %402 = vst [vmem:[%s396 + $0x38] sm:$0x1] 0.0
    %403 = vst [vmem:[%s396 + $0x40] sm:$0x1] 0.0
    %404 = vst [vmem:[%s396 + $0x48] sm:$0x1] 0.0
    %405 = vst [vmem:[%s396 + $0x5] sm:$0x1] 0.0
    %406 = vst [vmem:[%s396 + $0xd] sm:$0x1] 0.0
    %407 = vst [vmem:[%s396 + $0x15] sm:$0x1] 0.0
    %408 = vst [vmem:[%s396 + $0x1d] sm:$0x1] 0.0
    %409 = vst [vmem:[%s396 + $0x35] sm:$0x1] 0.0
    %410 = vst [vmem:[%s396 + $0x3d] sm:$0x1] 0.0
    %411 = vst [vmem:[%s396 + $0x45] sm:$0x1] 0.0
    %412 = vst [vmem:[%s396 + $0x4d] sm:$0x1] 0.0
    %v417 = vcombine.high %v387, %v387
    %v418 = vcombine.high %v388, %v388
    %v419 = vcombine.high %v389, %v389
    %v420 = vcombine.high %v390, %v390
    %425 = vst [vmem:[%s396 + $0x1] sm:$0xf] %v387
    %426 = vst [vmem:[%s396 + $0x9] sm:$0xf] %v417
    %427 = vst [vmem:[%s396 + $0x11] sm:$0xf] %v388
    %428 = vst [vmem:[%s396 + $0x19] sm:$0xf] %v418
    %429 = vst [vmem:[%s396 + $0x31] sm:$0xf] %v389
    %430 = vst [vmem:[%s396 + $0x39] sm:$0xf] %v419
    %431 = vst [vmem:[%s396 + $0x41] sm:$0xf] %v390
    %432 = vst [vmem:[%s396 + $0x49] sm:$0xf] %v420
    %v433 = vld [vmem:[%s5] sm:$0xff]
    %v434 = vld [vmem:[%s5 + $0x8] sm:$0x1]
    %v435 = vld [vmem:[#allocation2] sm:$0xf]
    %v436 = vld [vmem:[#allocation2 + $0x8] sm:$0xf]
    %v437 = vld [vmem:[#allocation2 + $0x10] sm:$0xf]
    %v438 = vld [vmem:[#allocation2 + $0x18] sm:$0xf]
    %v439 = vld [vmem:[#allocation2 + $0x30] sm:$0xf]
    %v440 = vld [vmem:[#allocation2 + $0x38] sm:$0xf]
    %v441 = vld [vmem:[#allocation2 + $0x40] sm:$0xf]
    %v442 = vld [vmem:[#allocation2 + $0x48] sm:$0xf]
    %v443 = vlaneseq
    %v444 = vshrl.u32 %v443, 7
    %v445 = vsub.s32 0, %v444
    %v446 = vrot.slane %v433, %v445
    %v447 = vmul.f32 %v435, %v446
    %v448 = vmul.f32 %v436, %v446
    %v449 = vmul.f32 %v437, %v446
    %v450 = vmul.f32 %v438, %v446
    %v451 = vmul.f32 %v439, %v446
    %v452 = vmul.f32 %v440, %v446
    %v453 = vmul.f32 %v441, %v446
    %v454 = vmul.f32 %v442, %v446
    %v455 = vld [vmem:[#allocation2 + $0x1] sm:$0xf]
    %v456 = vld [vmem:[#allocation2 + $0x9] sm:$0xf]
    %v457 = vld [vmem:[#allocation2 + $0x11] sm:$0xf]
    %v458 = vld [vmem:[#allocation2 + $0x19] sm:$0xf]
    %v459 = vld [vmem:[#allocation2 + $0x31] sm:$0xf]
    %v460 = vld [vmem:[#allocation2 + $0x39] sm:$0xf]
    %v461 = vld [vmem:[#allocation2 + $0x41] sm:$0xf]
    %v462 = vld [vmem:[#allocation2 + $0x49] sm:$0xf]
    %v463 = vlaneseq
    %v464 = vshrl.u32 %v463, 7
    %v465 = vsub.s32 1, %v464
    %v466 = vrot.slane %v433, %v465
    %v467 = vmul.f32 %v455, %v466
    %v468 = vmul.f32 %v456, %v466
    %v469 = vmul.f32 %v457, %v466
    %v470 = vmul.f32 %v458, %v466
    %v471 = vmul.f32 %v459, %v466
    %v472 = vmul.f32 %v460, %v466
    %v473 = vmul.f32 %v461, %v466
    %v474 = vmul.f32 %v462, %v466
    %v475 = vadd.f32 %v447, %v467
    %v476 = vadd.f32 %v448, %v468
    %v477 = vadd.f32 %v449, %v469
    %v478 = vadd.f32 %v450, %v470
    %v479 = vadd.f32 %v451, %v471
    %v480 = vadd.f32 %v452, %v472
    %v481 = vadd.f32 %v453, %v473
    %v482 = vadd.f32 %v454, %v474
    %v483 = vld [vmem:[#allocation2 + $0x2] sm:$0xf]
    %v484 = vld [vmem:[#allocation2 + $0xa] sm:$0xf]
    %v485 = vld [vmem:[#allocation2 + $0x12] sm:$0xf]
    %v486 = vld [vmem:[#allocation2 + $0x1a] sm:$0xf]
    %v487 = vld [vmem:[#allocation2 + $0x32] sm:$0xf]
    %v488 = vld [vmem:[#allocation2 + $0x3a] sm:$0xf]
    %v489 = vld [vmem:[#allocation2 + $0x42] sm:$0xf]
    %v490 = vld [vmem:[#allocation2 + $0x4a] sm:$0xf]
    %v491 = vlaneseq
    %v492 = vshrl.u32 %v491, 7
    %v493 = vsub.s32 2, %v492
    %v494 = vrot.slane %v433, %v493
    %v495 = vmul.f32 %v483, %v494
    %v496 = vmul.f32 %v484, %v494
    %v497 = vmul.f32 %v485, %v494
    %v498 = vmul.f32 %v486, %v494
    %v499 = vmul.f32 %v487, %v494
    %v500 = vmul.f32 %v488, %v494
    %v501 = vmul.f32 %v489, %v494
    %v502 = vmul.f32 %v490, %v494
    %v503 = vadd.f32 %v475, %v495
    %v504 = vadd.f32 %v476, %v496
    %v505 = vadd.f32 %v477, %v497
    %v506 = vadd.f32 %v478, %v498
    %v507 = vadd.f32 %v479, %v499
    %v508 = vadd.f32 %v480, %v500
    %v509 = vadd.f32 %v481, %v501
    %v510 = vadd.f32 %v482, %v502
    %v511 = vld [vmem:[%s396] sm:$0xf]
    %v512 = vld [vmem:[%s396 + $0x8] sm:$0xf]
    %v513 = vld [vmem:[%s396 + $0x10] sm:$0xf]
    %v514 = vld [vmem:[%s396 + $0x18] sm:$0xf]
    %v515 = vld [vmem:[%s396 + $0x30] sm:$0xf]
    %v516 = vld [vmem:[%s396 + $0x38] sm:$0xf]
    %v517 = vld [vmem:[%s396 + $0x40] sm:$0xf]
    %v518 = vld [vmem:[%s396 + $0x48] sm:$0xf]
    %v519 = vlaneseq
    %v520 = vshrl.u32 %v519, 7
    %v521 = vsub.s32 3, %v520
    %v522 = vrot.slane %v433, %v521
    %v523 = vmul.f32 %v511, %v522
    %v524 = vmul.f32 %v512, %v522
    %v525 = vmul.f32 %v513, %v522
    %v526 = vmul.f32 %v514, %v522
    %v527 = vmul.f32 %v515, %v522
    %v528 = vmul.f32 %v516, %v522
    %v529 = vmul.f32 %v517, %v522
    %v530 = vmul.f32 %v518, %v522
    %v531 = vadd.f32 %v503, %v523
    %v532 = vadd.f32 %v504, %v524
    %v533 = vadd.f32 %v505, %v525
    %v534 = vadd.f32 %v506, %v526
    %v535 = vadd.f32 %v507, %v527
    %v536 = vadd.f32 %v508, %v528
    %v537 = vadd.f32 %v509, %v529
    %v538 = vadd.f32 %v510, %v530
    %v539 = vld [vmem:[%s396 + $0x1] sm:$0xf]
    %v540 = vld [vmem:[%s396 + $0x9] sm:$0xf]
    %v541 = vld [vmem:[%s396 + $0x11] sm:$0xf]
    %v542 = vld [vmem:[%s396 + $0x19] sm:$0xf]
    %v543 = vld [vmem:[%s396 + $0x31] sm:$0xf]
    %v544 = vld [vmem:[%s396 + $0x39] sm:$0xf]
    %v545 = vld [vmem:[%s396 + $0x41] sm:$0xf]
    %v546 = vld [vmem:[%s396 + $0x49] sm:$0xf]
    %v547 = vlaneseq
    %v548 = vshrl.u32 %v547, 7
    %v549 = vsub.s32 4, %v548
    %v550 = vrot.slane %v433, %v549
    %v551 = vmul.f32 %v539, %v550
    %v552 = vmul.f32 %v540, %v550
    %v553 = vmul.f32 %v541, %v550
    %v554 = vmul.f32 %v542, %v550
    %v555 = vmul.f32 %v543, %v550
    %v556 = vmul.f32 %v544, %v550
    %v557 = vmul.f32 %v545, %v550
    %v558 = vmul.f32 %v546, %v550
    %v559 = vadd.f32 %v531, %v551
    %v560 = vadd.f32 %v532, %v552
    %v561 = vadd.f32 %v533, %v553
    %v562 = vadd.f32 %v534, %v554
    %v563 = vadd.f32 %v535, %v555
    %v564 = vadd.f32 %v536, %v556
    %v565 = vadd.f32 %v537, %v557
    %v566 = vadd.f32 %v538, %v558
    %v567 = vld [vmem:[%s396 + $0x2] sm:$0xf]
    %v568 = vld [vmem:[%s396 + $0xa] sm:$0xf]
    %v569 = vld [vmem:[%s396 + $0x12] sm:$0xf]
    %v570 = vld [vmem:[%s396 + $0x1a] sm:$0xf]
    %v571 = vld [vmem:[%s396 + $0x32] sm:$0xf]
    %v572 = vld [vmem:[%s396 + $0x3a] sm:$0xf]
    %v573 = vld [vmem:[%s396 + $0x42] sm:$0xf]
    %v574 = vld [vmem:[%s396 + $0x4a] sm:$0xf]
    %v575 = vlaneseq
    %v576 = vshrl.u32 %v575, 7
    %v577 = vsub.s32 5, %v576
    %v578 = vrot.slane %v433, %v577
    %v579 = vmul.f32 %v567, %v578
    %v580 = vmul.f32 %v568, %v578
    %v581 = vmul.f32 %v569, %v578
    %v582 = vmul.f32 %v570, %v578
    %v583 = vmul.f32 %v571, %v578
    %v584 = vmul.f32 %v572, %v578
    %v585 = vmul.f32 %v573, %v578
    %v586 = vmul.f32 %v574, %v578
    %v587 = vadd.f32 %v559, %v579
    %v588 = vadd.f32 %v560, %v580
    %v589 = vadd.f32 %v561, %v581
    %v590 = vadd.f32 %v562, %v582
    %v591 = vadd.f32 %v563, %v583
    %v592 = vadd.f32 %v564, %v584
    %v593 = vadd.f32 %v565, %v585
    %v594 = vadd.f32 %v566, %v586
    %s595 = scalar_lea.vmem [#allocation2], 16
    %v596 = vld [vmem:[%s595] sm:$0xf]
    %v597 = vld [vmem:[%s595 + $0x8] sm:$0xf]
    %v598 = vld [vmem:[%s595 + $0x10] sm:$0xf]
    %v599 = vld [vmem:[%s595 + $0x18] sm:$0xf]
    %v600 = vld [vmem:[%s595 + $0x30] sm:$0xf]
    %v601 = vld [vmem:[%s595 + $0x38] sm:$0xf]
    %v602 = vld [vmem:[%s595 + $0x40] sm:$0xf]
    %v603 = vld [vmem:[%s595 + $0x48] sm:$0xf]
    %v604 = vlaneseq
    %v605 = vshrl.u32 %v604, 7
    %v606 = vsub.s32 6, %v605
    %v607 = vrot.slane %v433, %v606
    %v608 = vmul.f32 %v596, %v607
    %v609 = vmul.f32 %v597, %v607
    %v610 = vmul.f32 %v598, %v607
    %v611 = vmul.f32 %v599, %v607
    %v612 = vmul.f32 %v600, %v607
    %v613 = vmul.f32 %v601, %v607
    %v614 = vmul.f32 %v602, %v607
    %v615 = vmul.f32 %v603, %v607
    %v616 = vadd.f32 %v587, %v608
    %v617 = vadd.f32 %v588, %v609
    %v618 = vadd.f32 %v589, %v610
    %v619 = vadd.f32 %v590, %v611
    %v620 = vadd.f32 %v591, %v612
    %v621 = vadd.f32 %v592, %v613
    %v622 = vadd.f32 %v593, %v614
    %v623 = vadd.f32 %v594, %v615
    %v624 = vld [vmem:[%s595 + $0x1] sm:$0xf]
    %v625 = vld [vmem:[%s595 + $0x9] sm:$0xf]
    %v626 = vld [vmem:[%s595 + $0x11] sm:$0xf]
    %v627 = vld [vmem:[%s595 + $0x19] sm:$0xf]
    %v628 = vld [vmem:[%s595 + $0x31] sm:$0xf]
    %v629 = vld [vmem:[%s595 + $0x39] sm:$0xf]
    %v630 = vld [vmem:[%s595 + $0x41] sm:$0xf]
    %v631 = vld [vmem:[%s595 + $0x49] sm:$0xf]
    %v632 = vlaneseq
    %v633 = vshrl.u32 %v632, 7
    %v634 = vsub.s32 7, %v633
    %v635 = vrot.slane %v433, %v634
    %v636 = vmul.f32 %v624, %v635
    %v637 = vmul.f32 %v625, %v635
    %v638 = vmul.f32 %v626, %v635
    %v639 = vmul.f32 %v627, %v635
    %v640 = vmul.f32 %v628, %v635
    %v641 = vmul.f32 %v629, %v635
    %v642 = vmul.f32 %v630, %v635
    %v643 = vmul.f32 %v631, %v635
    %v644 = vadd.f32 %v616, %v636
    %v645 = vadd.f32 %v617, %v637
    %v646 = vadd.f32 %v618, %v638
    %v647 = vadd.f32 %v619, %v639
    %v648 = vadd.f32 %v620, %v640
    %v649 = vadd.f32 %v621, %v641
    %v650 = vadd.f32 %v622, %v642
    %v651 = vadd.f32 %v623, %v643
    %v652 = vld [vmem:[%s595 + $0x2] sm:$0xf]
    %v653 = vld [vmem:[%s595 + $0xa] sm:$0xf]
    %v654 = vld [vmem:[%s595 + $0x12] sm:$0xf]
    %v655 = vld [vmem:[%s595 + $0x1a] sm:$0xf]
    %v656 = vld [vmem:[%s595 + $0x32] sm:$0xf]
    %v657 = vld [vmem:[%s595 + $0x3a] sm:$0xf]
    %v658 = vld [vmem:[%s595 + $0x42] sm:$0xf]
    %v659 = vld [vmem:[%s595 + $0x4a] sm:$0xf]
    %v660 = vlaneseq
    %v661 = vshrl.u32 %v660, 7
    %v662 = vsub.s32 0, %v661
    %v663 = vrot.slane %v434, %v662
    %v664 = vmul.f32 %v652, %v663
    %v665 = vmul.f32 %v653, %v663
    %v666 = vmul.f32 %v654, %v663
    %v667 = vmul.f32 %v655, %v663
    %v668 = vmul.f32 %v656, %v663
    %v669 = vmul.f32 %v657, %v663
    %v670 = vmul.f32 %v658, %v663
    %v671 = vmul.f32 %v659, %v663
    %v672 = vadd.f32 %v644, %v664
    %v673 = vadd.f32 %v645, %v665
    %v674 = vadd.f32 %v646, %v666
    %v675 = vadd.f32 %v647, %v667
    %v676 = vadd.f32 %v648, %v668
    %v677 = vadd.f32 %v649, %v669
    %v678 = vadd.f32 %v650, %v670
    %v679 = vadd.f32 %v651, %v671
    %v680 = vld [vmem:[%s6] sm:$0x1]
    %v682 = vlaneseq
    %v683 = vshrl.u32 %v682, 7
    %v684 = vsub.s32 0, %v683
    %v685 = vrot.slane %v680, %v684
    %v687 = vadd.f32 %v672, %v685
    %v688 = vadd.f32 %v673, %v685
    %v689 = vadd.f32 %v674, %v685
    %v690 = vadd.f32 %v675, %v685
    %v691 = vadd.f32 %v676, %v685
    %v692 = vadd.f32 %v677, %v685
    %v693 = vadd.f32 %v678, %v685
    %v694 = vadd.f32 %v679, %v685
    %v703 = vcombine.low %v687, %v688
    %v704 = vcombine.low %v689, %v690
    %v705 = vcombine.low %v691, %v692
    %v706 = vcombine.low %v693, %v694
    %v711 = vpack.c.bf16 %v704, %v703
    %v712 = vpack.c.bf16 %v706, %v705
    %v713 = vld [vmem:[#allocation6] sm:$0xf]
    %v714 = vld [vmem:[#allocation6 + $0x4] sm:$0xf]
    %v715 = vld [vmem:[#allocation6 + $0x8] sm:$0xf]
    %v716 = vld [vmem:[#allocation6 + $0xc] sm:$0xf]
    %v717 = vld [vmem:[#allocation6 + $0x10] sm:$0xf]
    %v718 = vld [vmem:[#allocation6 + $0x14] sm:$0xf]
    %v719 = vld [vmem:[#allocation6 + $0x18] sm:$0xf]
    %v720 = vld [vmem:[#allocation6 + $0x1c] sm:$0xf]
    %v721 = vld [vmem:[#allocation6 + $0x20] sm:$0xf]
    %v722 = vld [vmem:[#allocation6 + $0x24] sm:$0xf]
    %v723 = vld [vmem:[#allocation6 + $0x28] sm:$0xf]
    %v724 = vld [vmem:[#allocation6 + $0x2c] sm:$0xf]
    %v725 = vld [vmem:[#allocation6 + $0x30] sm:$0xf]
    %v726 = vld [vmem:[#allocation6 + $0x34] sm:$0xf]
    %v727 = vld [vmem:[#allocation6 + $0x38] sm:$0xf]
    %v728 = vld [vmem:[#allocation6 + $0x3c] sm:$0xf]
    %v729 = vld [vmem:[%s8] sm:$0x1]
    %v731 = vlaneseq
    %v732 = vshrl.u32 %v731, 7
    %v733 = vsub.s32 0, %v732
    %v734 = vrot.slane %v729, %v733
    %v752 = vunpack.c.l.b16 %v713
    %v753 = vunpack.c.l.b16 %v714
    %v754 = vunpack.c.l.b16 %v715
    %v755 = vunpack.c.l.b16 %v716
    %v756 = vunpack.c.l.b16 %v717
    %v757 = vunpack.c.l.b16 %v718
    %v758 = vunpack.c.l.b16 %v719
    %v759 = vunpack.c.l.b16 %v720
    %v760 = vunpack.c.l.b16 %v721
    %v761 = vunpack.c.l.b16 %v722
    %v762 = vunpack.c.l.b16 %v723
    %v763 = vunpack.c.l.b16 %v724
    %v764 = vunpack.c.l.b16 %v725
    %v765 = vunpack.c.l.b16 %v726
    %v766 = vunpack.c.l.b16 %v727
    %v767 = vunpack.c.l.b16 %v728
    %v768 = vpack.c.b16 %v753, %v752
    %v769 = vpack.c.b16 %v755, %v754
    %v770 = vpack.c.b16 %v757, %v756
    %v771 = vpack.c.b16 %v759, %v758
    %v772 = vpack.c.b16 %v761, %v760
    %v773 = vpack.c.b16 %v763, %v762
    %v774 = vpack.c.b16 %v765, %v764
    %v775 = vpack.c.b16 %v767, %v766
    %784 = vmatprep.subr.bf16.mxu0 0
    %785 = vmatpush1.bf16.msra.mxu0 %v768
    %786 = vmatprep.subr.bf16.mxu0 0
    %787 = vmatpush1.bf16.msra.mxu0 %v769
    %788 = vmatprep.subr.bf16.mxu0 0
    %789 = vmatpush1.bf16.msra.mxu0 %v770
    %790 = vmatprep.subr.bf16.mxu0 0
    %791 = vmatpush1.bf16.msra.mxu0 %v771
    %792 = vmatprep.subr.bf16.mxu0 0
    %793 = vmatpush1.bf16.msra.mxu0 %v772
    %794 = vmatprep.subr.bf16.mxu0 0
    %795 = vmatpush1.bf16.msra.mxu0 %v773
    %796 = vmatprep.subr.bf16.mxu0 0
    %797 = vmatpush1.bf16.msra.mxu0 %v774
    %798 = vmatprep.subr.bf16.mxu0 0
    %799 = vmatpush1.bf16.msra.mxu0 %v775
    %800 = vmatprep.subr.bf16.mxu0 0
    %801 = vmatpush1.bf16.msra.mxu0 0
    %802 = vmatprep.subr.bf16.mxu0 0
    %803 = vmatpush1.bf16.msra.mxu0 0
    %804 = vmatprep.subr.bf16.mxu0 0
    %805 = vmatpush1.bf16.msra.mxu0 0
    %806 = vmatprep.subr.bf16.mxu0 0
    %807 = vmatpush1.bf16.msra.mxu0 0
    %808 = vmatprep.subr.bf16.mxu0 0
    %809 = vmatpush1.bf16.msra.mxu0 0
    %810 = vmatprep.subr.bf16.mxu0 0
    %811 = vmatpush1.bf16.msra.mxu0 0
    %812 = vmatprep.subr.bf16.mxu0 0
    %813 = vmatpush1.bf16.msra.mxu0 0
    %814 = vmatprep.subr.bf16.mxu0 0
    %815 = vmatpush1.bf16.msra.mxu0 0
    %816 = vmatprep.mubr.bf16.mxu0 0
    %817 = vmatmul.mubr.bf16.gmra.mrb[0].mxu0 %v711
    %v818 = vpop.f32.mrb[0].mxu0
    %v819 = vadd.f32 %v734, %v818
    %v820 = vpop.f32.mrb[0].mxu0
    %v821 = vpop.f32.mrb[0].mxu0
    %v822 = vadd.f32 %v734, %v821
    %v823 = vpop.f32.mrb[0].mxu0
    %824 = vmatprep.mubr.bf16.mxu0 0
    %825 = vmatmul.mubr.bf16.gmra.mrb[0].mxu0 %v712
    %v826 = vpop.f32.mrb[0].mxu0
    %v827 = vadd.f32 %v734, %v826
    %v828 = vpop.f32.mrb[0].mxu0
    %v829 = vpop.f32.mrb[0].mxu0
    %v830 = vadd.f32 %v734, %v829
    %v831 = vpop.f32.mrb[0].mxu0
    %832 = vdwg.mxu0
    %v833 = vld [vmem:[%s9] sm:$0x1]
    %v834 = vld [vmem:[%s10] sm:$0x1]
    %v835 = vadd.f32 %v819, %v822
    %v836 = vadd.f32 %v835, %v827
    %v837 = vadd.f32 %v836, %v830
    %v838 = vrot.slane %v837, 4
    %v839 = vadd.f32 %v837, %v838
    %v840 = vrot.slane %v839, 2
    %v841 = vadd.f32 %v839, %v840
    %v842 = vrot.slane %v841, 1
    %v843 = vadd.f32 %v841, %v842
    %v844 = vmul.f32 %v819, %v819
    %v845 = vmul.f32 %v822, %v822
    %v846 = vmul.f32 %v827, %v827
    %v847 = vmul.f32 %v830, %v830
    %v848 = vadd.f32 %v844, %v845
    %v849 = vadd.f32 %v848, %v846
    %v850 = vadd.f32 %v849, %v847
    %v851 = vrot.slane %v850, 4
    %v852 = vadd.f32 %v850, %v851
    %v853 = vrot.slane %v852, 2
    %v854 = vadd.f32 %v852, %v853
    %v855 = vrot.slane %v854, 1
    %v856 = vadd.f32 %v854, %v855
    %v857 = vmul.f32 %v843, 0.03125
    %v858 = vmul.f32 %v856, 0.03125
    %v859 = vmul.f32 %v857, %v857
    %v860 = vsub.f32 %v858, %v859
    %v861 = vmax.f32 %v860, 0.0
    %v862 = vadd.f32 %v861, 1e-05
    %v863 = vrsqrt.pop %v862
    %v864 = vmul.f32 %v833, %v863
    %v865 = vmul.f32 %v857, %v864
    %v866 = vsub.f32 %v834, %v865
    %v868 = vlaneseq
    %v869 = vshrl.u32 %v868, 7
    %v870 = vsub.s32 0, %v869
    %v871 = vrot.slane %v864, %v870
    %v873 = vmul.f32 %v819, %v871
    %v874 = vmul.f32 %v822, %v871
    %v875 = vmul.f32 %v827, %v871
    %v876 = vmul.f32 %v830, %v871
    %v878 = vlaneseq
    %v879 = vshrl.u32 %v878, 7
    %v880 = vsub.s32 0, %v879
    %v881 = vrot.slane %v866, %v880
    %v883 = vadd.f32 %v873, %v881
    %v884 = vadd.f32 %v874, %v881
    %v885 = vadd.f32 %v875, %v881
    %v886 = vadd.f32 %v876, %v881
    %v887 = vmul.f32 %v883, 0.5
    %v888 = vmul.f32 %v884, 0.5
    %v889 = vmul.f32 %v885, 0.5
    %v890 = vmul.f32 %v886, 0.5
    %v891 = vmul.f32 %v883, 0.70710677
    %v892 = vmul.f32 %v884, 0.70710677
    %v893 = vmul.f32 %v885, 0.70710677
    %v894 = vmul.f32 %v886, 0.70710677
    %vm895 = vcmp.ge.f32.partialorder %v891, 0.0
    %vm896 = vcmp.ge.f32.partialorder %v892, 0.0
    %vm897 = vcmp.ge.f32.partialorder %v893, 0.0
    %vm898 = vcmp.ge.f32.partialorder %v894, 0.0
    %v899 = vsel %vm895, 1.0, -1.0
    %v900 = vsel %vm896, 1.0, -1.0
    %v901 = vsel %vm897, 1.0, -1.0
    %v902 = vsel %vm898, 1.0, -1.0
    %v903 = vand.u32 2147483647, %v891
    %v904 = vand.u32 2147483647, %v892
    %v905 = vand.u32 2147483647, %v893
    %v906 = vand.u32 2147483647, %v894
    %v907 = vmul.f32 %v903, 0.3275911
    %v908 = vmul.f32 %v904, 0.3275911
    %v909 = vmul.f32 %v905, 0.3275911
    %v910 = vmul.f32 %v906, 0.3275911
    %v911 = vadd.f32 %v907, 1.0
    %v912 = vadd.f32 %v908, 1.0
    %v913 = vadd.f32 %v909, 1.0
    %v914 = vadd.f32 %v910, 1.0
    %v915 = vrcp.pop %v911
    %v916 = vrcp.pop %v912
    %v917 = vrcp.pop %v913
    %v918 = vrcp.pop %v914
    %v919 = vmul.f32 %v915, 1.0614054
    %v920 = vmul.f32 %v916, 1.0614054
    %v921 = vmul.f32 %v917, 1.0614054
    %v922 = vmul.f32 %v918, 1.0614054
    %v923 = vadd.f32 %v919, -1.4531521
    %v924 = vadd.f32 %v920, -1.4531521
    %v925 = vadd.f32 %v921, -1.4531521
    %v926 = vadd.f32 %v922, -1.4531521
    %v927 = vmul.f32 %v923, %v915
    %v928 = vmul.f32 %v924, %v916
    %v929 = vmul.f32 %v925, %v917
    %v930 = vmul.f32 %v926, %v918
    %v931 = vadd.f32 %v927, 1.4214138
    %v932 = vadd.f32 %v928, 1.4214138
    %v933 = vadd.f32 %v929, 1.4214138
    %v934 = vadd.f32 %v930, 1.4214138
    %v935 = vmul.f32 %v931, %v915
    %v936 = vmul.f32 %v932, %v916
    %v937 = vmul.f32 %v933, %v917
    %v938 = vmul.f32 %v934, %v918
    %v939 = vadd.f32 %v935, -0.28449672
    %v940 = vadd.f32 %v936, -0.28449672
    %v941 = vadd.f32 %v937, -0.28449672
    %v942 = vadd.f32 %v938, -0.28449672
    %v943 = vmul.f32 %v939, %v915
    %v944 = vmul.f32 %v940, %v916
    %v945 = vmul.f32 %v941, %v917
    %v946 = vmul.f32 %v942, %v918
    %v947 = vadd.f32 %v943, 0.2548296
    %v948 = vadd.f32 %v944, 0.2548296
    %v949 = vadd.f32 %v945, 0.2548296
    %v950 = vadd.f32 %v946, 0.2548296
    %v951 = vmul.f32 %v947, %v915
    %v952 = vmul.f32 %v948, %v916
    %v953 = vmul.f32 %v949, %v917
    %v954 = vmul.f32 %v950, %v918
    %v955 = vsub.f32 0.0, %v903
    %v956 = vsub.f32 0.0, %v904
    %v957 = vsub.f32 0.0, %v905
    %v958 = vsub.f32 0.0, %v906
    %v959 = vmul.f32 %v955, %v903
    %v960 = vmul.f32 %v956, %v904
    %v961 = vmul.f32 %v957, %v905
    %v962 = vmul.f32 %v958, %v906
    %v963 = vmul.f32 %v959, 1.442695
    %v964 = vpow.pop %v963
    %v965 = vmul.f32 %v960, 1.442695
    %v966 = vpow.pop %v965
    %v967 = vmul.f32 %v961, 1.442695
    %v968 = vpow.pop %v967
    %v969 = vmul.f32 %v962, 1.442695
    %v970 = vpow.pop %v969
    %v971 = vmul.f32 %v951, %v964
    %v972 = vmul.f32 %v952, %v966
    %v973 = vmul.f32 %v953, %v968
    %v974 = vmul.f32 %v954, %v970
    %v975 = vsub.f32 1.0, %v971
    %v976 = vsub.f32 1.0, %v972
    %v977 = vsub.f32 1.0, %v973
    %v978 = vsub.f32 1.0, %v974
    %v979 = vmul.f32 %v899, %v975
    %v980 = vmul.f32 %v900, %v976
    %v981 = vmul.f32 %v901, %v977
    %v982 = vmul.f32 %v902, %v978
    %v983 = vadd.f32 %v979, 1.0
    %v984 = vadd.f32 %v980, 1.0
    %v985 = vadd.f32 %v981, 1.0
    %v986 = vadd.f32 %v982, 1.0
    %v987 = vmul.f32 %v887, %v983
    %v988 = vmul.f32 %v888, %v984
    %v989 = vmul.f32 %v889, %v985
    %v990 = vmul.f32 %v890, %v986
    %v991 = vpack.c.bf16 %v988, %v987
    %v992 = vpack.c.bf16 %v990, %v989
    %v993 = vld [vmem:[#allocation8] sm:$0xf]
    %v994 = vld [vmem:[#allocation8 + $0x4] sm:$0xf]
    %v995 = vld [vmem:[#allocation8 + $0x8] sm:$0xf]
    %v996 = vld [vmem:[#allocation8 + $0xc] sm:$0xf]
    %v997 = vld [vmem:[#allocation8 + $0x10] sm:$0xf]
    %v998 = vld [vmem:[#allocation8 + $0x14] sm:$0xf]
    %v999 = vld [vmem:[#allocation8 + $0x18] sm:$0xf]
    %v1000 = vld [vmem:[#allocation8 + $0x1c] sm:$0xf]
    %v1001 = vld [vmem:[#allocation8 + $0x20] sm:$0xf]
    %v1002 = vld [vmem:[#allocation8 + $0x24] sm:$0xf]
    %v1003 = vld [vmem:[#allocation8 + $0x28] sm:$0xf]
    %v1004 = vld [vmem:[#allocation8 + $0x2c] sm:$0xf]
    %v1005 = vld [vmem:[#allocation8 + $0x30] sm:$0xf]
    %v1006 = vld [vmem:[#allocation8 + $0x34] sm:$0xf]
    %v1007 = vld [vmem:[#allocation8 + $0x38] sm:$0xf]
    %v1008 = vld [vmem:[#allocation8 + $0x3c] sm:$0xf]
    %v1009 = vld [vmem:[%s12] sm:$0x1]
    %v1011 = vlaneseq
    %v1012 = vshrl.u32 %v1011, 7
    %v1013 = vsub.s32 0, %v1012
    %v1014 = vrot.slane %v1009, %v1013
    %v1032 = vunpack.c.l.b16 %v993
    %v1033 = vunpack.c.l.b16 %v994
    %v1034 = vunpack.c.l.b16 %v995
    %v1035 = vunpack.c.l.b16 %v996
    %v1036 = vunpack.c.l.b16 %v997
    %v1037 = vunpack.c.l.b16 %v998
    %v1038 = vunpack.c.l.b16 %v999
    %v1039 = vunpack.c.l.b16 %v1000
    %v1040 = vunpack.c.l.b16 %v1001
    %v1041 = vunpack.c.l.b16 %v1002
    %v1042 = vunpack.c.l.b16 %v1003
    %v1043 = vunpack.c.l.b16 %v1004
    %v1044 = vunpack.c.l.b16 %v1005
    %v1045 = vunpack.c.l.b16 %v1006
    %v1046 = vunpack.c.l.b16 %v1007
    %v1047 = vunpack.c.l.b16 %v1008
    %v1048 = vpack.c.b16 %v1033, %v1032
    %v1049 = vpack.c.b16 %v1035, %v1034
    %v1050 = vpack.c.b16 %v1037, %v1036
    %v1051 = vpack.c.b16 %v1039, %v1038
    %v1052 = vpack.c.b16 %v1041, %v1040
    %v1053 = vpack.c.b16 %v1043, %v1042
    %v1054 = vpack.c.b16 %v1045, %v1044
    %v1055 = vpack.c.b16 %v1047, %v1046
    %1064 = vmatprep.subr.bf16.mxu0 0
    %1065 = vmatpush1.bf16.msra.mxu0 %v1048
    %1066 = vmatprep.subr.bf16.mxu0 0
    %1067 = vmatpush1.bf16.msra.mxu0 %v1049
    %1068 = vmatprep.subr.bf16.mxu0 0
    %1069 = vmatpush1.bf16.msra.mxu0 %v1050
    %1070 = vmatprep.subr.bf16.mxu0 0
    %1071 = vmatpush1.bf16.msra.mxu0 %v1051
    %1072 = vmatprep.subr.bf16.mxu0 0
    %1073 = vmatpush1.bf16.msra.mxu0 %v1052
    %1074 = vmatprep.subr.bf16.mxu0 0
    %1075 = vmatpush1.bf16.msra.mxu0 %v1053
    %1076 = vmatprep.subr.bf16.mxu0 0
    %1077 = vmatpush1.bf16.msra.mxu0 %v1054
    %1078 = vmatprep.subr.bf16.mxu0 0
    %1079 = vmatpush1.bf16.msra.mxu0 %v1055
    %1080 = vmatprep.subr.bf16.mxu0 0
    %1081 = vmatpush1.bf16.msra.mxu0 0
    %1082 = vmatprep.subr.bf16.mxu0 0
    %1083 = vmatpush1.bf16.msra.mxu0 0
    %1084 = vmatprep.subr.bf16.mxu0 0
    %1085 = vmatpush1.bf16.msra.mxu0 0
    %1086 = vmatprep.subr.bf16.mxu0 0
    %1087 = vmatpush1.bf16.msra.mxu0 0
    %1088 = vmatprep.subr.bf16.mxu0 0
    %1089 = vmatpush1.bf16.msra.mxu0 0
    %1090 = vmatprep.subr.bf16.mxu0 0
    %1091 = vmatpush1.bf16.msra.mxu0 0
    %1092 = vmatprep.subr.bf16.mxu0 0
    %1093 = vmatpush1.bf16.msra.mxu0 0
    %1094 = vmatprep.subr.bf16.mxu0 0
    %1095 = vmatpush1.bf16.msra.mxu0 0
    %1096 = vmatprep.mubr.bf16.mxu0 0
    %1097 = vmatmul.mubr.bf16.gmra.mrb[0].mxu0 %v991
    %v1098 = vpop.f32.mrb[0].mxu0
    %v1099 = vadd.f32 %v1014, %v1098
    %v1100 = vpop.f32.mrb[0].mxu0
    %v1101 = vpop.f32.mrb[0].mxu0
    %v1102 = vadd.f32 %v1014, %v1101
    %v1103 = vpop.f32.mrb[0].mxu0
    %1104 = vmatprep.mubr.bf16.mxu0 0
    %1105 = vmatmul.mubr.bf16.gmra.mrb[0].mxu0 %v992
    %v1106 = vpop.f32.mrb[0].mxu0
    %v1107 = vadd.f32 %v1014, %v1106
    %v1108 = vpop.f32.mrb[0].mxu0
    %v1109 = vpop.f32.mrb[0].mxu0
    %v1110 = vadd.f32 %v1014, %v1109
    %v1111 = vpop.f32.mrb[0].mxu0
    %1112 = vdwg.mxu0
    %v1113 = vld [vmem:[%s13] sm:$0xff]
    %v1114 = vld [vmem:[%s13 + $0x8] sm:$0xff]
    %v1115 = vld [vmem:[%s14] sm:$0xff]
    %v1116 = vld [vmem:[%s14 + $0x8] sm:$0xff]
    %v1117 = vadd.f32 %v1099, %v1107
    %1118 = vadd.xlane.f32.xlu0 %v1117
    %v1119 = vpop.xlane.xlu0 %1118
    %v1120 = vadd.f32 %v1102, %v1110
    %1121 = vadd.xlane.f32.xlu0 %v1120
    %v1122 = vpop.xlane.xlu0 %1121
    %v1123 = vmul.f32 %v1099, %v1099
    %v1124 = vmul.f32 %v1102, %v1102
    %v1125 = vmul.f32 %v1107, %v1107
    %v1126 = vmul.f32 %v1110, %v1110
    %v1127 = vadd.f32 %v1123, %v1125
    %1128 = vadd.xlane.f32.xlu0 %v1127
    %v1129 = vpop.xlane.xlu0 %1128
    %v1130 = vadd.f32 %v1124, %v1126
    %1131 = vadd.xlane.f32.xlu0 %v1130
    %v1132 = vpop.xlane.xlu0 %1131
    %v1133 = vmul.f32 %v1119, 0.0625
    %v1134 = vmul.f32 %v1122, 0.0625
    %v1135 = vmul.f32 %v1129, 0.0625
    %v1136 = vmul.f32 %v1132, 0.0625
    %v1137 = vmul.f32 %v1133, %v1133
    %v1138 = vmul.f32 %v1134, %v1134
    %v1139 = vsub.f32 %v1135, %v1137
    %v1140 = vsub.f32 %v1136, %v1138
    %v1141 = vmax.f32 %v1139, 0.0
    %v1142 = vmax.f32 %v1140, 0.0
    %v1143 = vadd.f32 %v1141, 1e-05
    %v1144 = vadd.f32 %v1142, 1e-05
    %v1145 = vrsqrt.pop %v1143
    %v1146 = vrsqrt.pop %v1144
    %v1147 = vmul.f32 %v1113, %v1145
    %v1148 = vmul.f32 %v1114, %v1146
    %v1149 = vmul.f32 %v1133, %v1147
    %v1150 = vmul.f32 %v1134, %v1148
    %v1151 = vsub.f32 %v1115, %v1149
    %v1152 = vsub.f32 %v1116, %v1150
    %1154 = vset.pattern.permute.xlu0 0
    %1155 = vperm.xlu0 %1154, %v1147
    %v1156 = vpop.permute.xlu0 %1155
    %1159 = vset.pattern.permute.xlu0 0
    %1160 = vperm.xlu0 %1159, %v1148
    %v1161 = vpop.permute.xlu0 %1160
    %v1163 = vmul.f32 %v1099, %v1156
    %v1164 = vmul.f32 %v1102, %v1161
    %v1165 = vmul.f32 %v1107, %v1156
    %v1166 = vmul.f32 %v1110, %v1161
    %1168 = vset.pattern.permute.xlu0 0
    %1169 = vperm.xlu0 %1168, %v1151
    %v1170 = vpop.permute.xlu0 %1169
    %1173 = vset.pattern.permute.xlu0 0
    %1174 = vperm.xlu0 %1173, %v1152
    %v1175 = vpop.permute.xlu0 %1174
    %v1177 = vadd.f32 %v1163, %v1170
    %v1178 = vadd.f32 %v1164, %v1175
    %v1179 = vadd.f32 %v1165, %v1170
    %v1180 = vadd.f32 %v1166, %v1175
    %v1181 = vmul.f32 %v1177, 0.5
    %v1182 = vmul.f32 %v1178, 0.5
    %v1183 = vmul.f32 %v1179, 0.5
    %v1184 = vmul.f32 %v1180, 0.5
    %v1185 = vmul.f32 %v1177, 0.70710677
    %v1186 = vmul.f32 %v1178, 0.70710677
    %v1187 = vmul.f32 %v1179, 0.70710677
    %v1188 = vmul.f32 %v1180, 0.70710677
    %vm1189 = vcmp.ge.f32.partialorder %v1185, 0.0
    %vm1190 = vcmp.ge.f32.partialorder %v1186, 0.0
    %vm1191 = vcmp.ge.f32.partialorder %v1187, 0.0
    %vm1192 = vcmp.ge.f32.partialorder %v1188, 0.0
    %v1193 = vsel %vm1189, 1.0, -1.0
    %v1194 = vsel %vm1190, 1.0, -1.0
    %v1195 = vsel %vm1191, 1.0, -1.0
    %v1196 = vsel %vm1192, 1.0, -1.0
    %v1197 = vand.u32 2147483647, %v1185
    %v1198 = vand.u32 2147483647, %v1186
    %v1199 = vand.u32 2147483647, %v1187
    %v1200 = vand.u32 2147483647, %v1188
    %v1201 = vmul.f32 %v1197, 0.3275911
    %v1202 = vmul.f32 %v1198, 0.3275911
    %v1203 = vmul.f32 %v1199, 0.3275911
    %v1204 = vmul.f32 %v1200, 0.3275911
    %v1205 = vadd.f32 %v1201, 1.0
    %v1206 = vadd.f32 %v1202, 1.0
    %v1207 = vadd.f32 %v1203, 1.0
    %v1208 = vadd.f32 %v1204, 1.0
    %v1209 = vrcp.pop %v1205
    %v1210 = vrcp.pop %v1206
    %v1211 = vrcp.pop %v1207
    %v1212 = vrcp.pop %v1208
    %v1213 = vmul.f32 %v1209, 1.0614054
    %v1214 = vmul.f32 %v1210, 1.0614054
    %v1215 = vmul.f32 %v1211, 1.0614054
    %v1216 = vmul.f32 %v1212, 1.0614054
    %v1217 = vadd.f32 %v1213, -1.4531521
    %v1218 = vadd.f32 %v1214, -1.4531521
    %v1219 = vadd.f32 %v1215, -1.4531521
    %v1220 = vadd.f32 %v1216, -1.4531521
    %v1221 = vmul.f32 %v1217, %v1209
    %v1222 = vmul.f32 %v1218, %v1210
    %v1223 = vmul.f32 %v1219, %v1211
    %v1224 = vmul.f32 %v1220, %v1212
    %v1225 = vadd.f32 %v1221, 1.4214138
    %v1226 = vadd.f32 %v1222, 1.4214138
    %v1227 = vadd.f32 %v1223, 1.4214138
    %v1228 = vadd.f32 %v1224, 1.4214138
    %v1229 = vmul.f32 %v1225, %v1209
    %v1230 = vmul.f32 %v1226, %v1210
    %v1231 = vmul.f32 %v1227, %v1211
    %v1232 = vmul.f32 %v1228, %v1212
    %v1233 = vadd.f32 %v1229, -0.28449672
    %v1234 = vadd.f32 %v1230, -0.28449672
    %v1235 = vadd.f32 %v1231, -0.28449672
    %v1236 = vadd.f32 %v1232, -0.28449672
    %v1237 = vmul.f32 %v1233, %v1209
    %v1238 = vmul.f32 %v1234, %v1210
    %v1239 = vmul.f32 %v1235, %v1211
    %v1240 = vmul.f32 %v1236, %v1212
    %v1241 = vadd.f32 %v1237, 0.2548296
    %v1242 = vadd.f32 %v1238, 0.2548296
    %v1243 = vadd.f32 %v1239, 0.2548296
    %v1244 = vadd.f32 %v1240, 0.2548296
    %v1245 = vmul.f32 %v1241, %v1209
    %v1246 = vmul.f32 %v1242, %v1210
    %v1247 = vmul.f32 %v1243, %v1211
    %v1248 = vmul.f32 %v1244, %v1212
    %v1249 = vsub.f32 0.0, %v1197
    %v1250 = vsub.f32 0.0, %v1198
    %v1251 = vsub.f32 0.0, %v1199
    %v1252 = vsub.f32 0.0, %v1200
    %v1253 = vmul.f32 %v1249, %v1197
    %v1254 = vmul.f32 %v1250, %v1198
    %v1255 = vmul.f32 %v1251, %v1199
    %v1256 = vmul.f32 %v1252, %v1200
    %v1257 = vmul.f32 %v1253, 1.442695
    %v1258 = vpow.pop %v1257
    %v1259 = vmul.f32 %v1254, 1.442695
    %v1260 = vpow.pop %v1259
    %v1261 = vmul.f32 %v1255, 1.442695
    %v1262 = vpow.pop %v1261
    %v1263 = vmul.f32 %v1256, 1.442695
    %v1264 = vpow.pop %v1263
    %v1265 = vmul.f32 %v1245, %v1258
    %v1266 = vmul.f32 %v1246, %v1260
    %v1267 = vmul.f32 %v1247, %v1262
    %v1268 = vmul.f32 %v1248, %v1264
    %v1269 = vsub.f32 1.0, %v1265
    %v1270 = vsub.f32 1.0, %v1266
    %v1271 = vsub.f32 1.0, %v1267
    %v1272 = vsub.f32 1.0, %v1268
    %v1273 = vmul.f32 %v1193, %v1269
    %v1274 = vmul.f32 %v1194, %v1270
    %v1275 = vmul.f32 %v1195, %v1271
    %v1276 = vmul.f32 %v1196, %v1272
    %v1277 = vadd.f32 %v1273, 1.0
    %v1278 = vadd.f32 %v1274, 1.0
    %v1279 = vadd.f32 %v1275, 1.0
    %v1280 = vadd.f32 %v1276, 1.0
    %v1281 = vmul.f32 %v1181, %v1277
    %v1282 = vmul.f32 %v1182, %v1278
    %v1283 = vmul.f32 %v1183, %v1279
    %v1284 = vmul.f32 %v1184, %v1280
    %1285 = vst [vmem:[#allocation9] sm:$0xff] %v1281
    %1286 = vst [vmem:[#allocation9 + $0x8] sm:$0xff] %v1282
    %1287 = vst [vmem:[#allocation9 + $0x10] sm:$0xff] %v1283
    %1288 = vst [vmem:[#allocation9 + $0x18] sm:$0xff] %v1284
    // Predicated region
    $region74: #{tpu_custom_call.1} parent=1 // pred_check
      _
    $region75: #{tpu_custom_call.1} parent=1 // pred_check_branch
      %1290 = sbr.rel (0) target = $region77
    $region76: #{tpu_custom_call.1} parent=1 // pred_region
      %s1292 = ssub.s32 512, 512
      %1293 = vsyncadd [#allocation5], %s1292
      %s1294 = sshll.u32 [#allocation9], 4
      %s1295 = int_to_ptr.vmem [resolvable:$true] %s1294
      %1300 = dma.vmem_to_hbm [thread:$0]  %s1295, 512, %s15, [#allocation5], 128, 128, 8
    $region77: #{tpu_custom_call.1} parent=1 // pred_fallthru
      _
    // Predicated region
    $region78: #{tpu_custom_call.1} parent=1 // pred_check
      _
    $region79: #{tpu_custom_call.1} parent=1 // pred_check_branch
      %1302 = sbr.rel (0) target = $region81
    $region80: #{tpu_custom_call.1} parent=1 // pred_region
      %1303 = dma.done [#allocation5], 512
    $region81: #{tpu_custom_call.1} parent=1 // pred_fallthru
      _
    %1304 = vsyncpa [#allocation4], 1
    %1305 = vsyncpa [#allocation7], 1
    %1306 = vsyncpa [#allocation5], 1

</llo_original>
